<compile_context>
chip_gen: v7x
topology: tpu7x:2x2x1
jax: 0.10.0
libtpu: 0.0.40
codegen_flags: <defaults>
</compile_context>

<pallas_src>
from functools import partial

import jax
import jax.numpy as jnp
from jax import lax
from jax.experimental import pallas as pl
from jax.experimental.pallas import tpu as pltpu


def _self_attn_kernel(x_ref, wqkv_ref, wproj_ref, bproj_ref, out_ref, attn_ref,
                      *, scale, num_heads, head_dim):
    """One grid step = one batch element; all heads processed in-kernel."""
    H, hd = num_heads, head_dim
    C = H * hd
    cdt = x_ref.dtype                         # compute dtype for MXU operands

    x = x_ref[0]                              # (N, C)

    # One wide QKV projection for all heads: full-K, full-lane MXU matmul.
    qkv_f32 = jnp.dot(x, wqkv_ref[...],
                      preferred_element_type=jnp.float32)       # (N, 3C) f32
    qkv = qkv_f32.astype(cdt)

    ctx_parts = []
    for h in range(H):                        # static unroll over heads
        q = qkv[:, h * hd:(h + 1) * hd]                         # (N, hd)
        k = qkv[:, C + h * hd:C + (h + 1) * hd]                 # (N, hd)
        v = qkv[:, 2 * C + h * hd:2 * C + (h + 1) * hd]         # (N, hd)

        # q @ k^T as a contraction over the last axis of both operands.
        s = lax.dot_general(q, k, (((1,), (1,)), ((), ())),
                            preferred_element_type=jnp.float32) * scale  # (N, N)

        # softmax in f32; exact reciprocal keeps parity with the reference.
        s = s - jnp.max(s, axis=-1, keepdims=True)
        e = jnp.exp(s)
        inv = pl.reciprocal(jnp.sum(e, axis=-1, keepdims=True), approx=False)
        p = e * inv                                              # (N, N) f32

        attn_ref[0, h] = p.astype(attn_ref.dtype)

        ctx_parts.append(jnp.dot(p.astype(cdt), v,
                                 preferred_element_type=jnp.float32))  # (N, hd)

    # "Concat heads" then one full-width output projection + bias (f32 add).
    ctx = jnp.concatenate(ctx_parts, axis=-1).astype(cdt)        # (N, C)
    out = jnp.dot(ctx, wproj_ref[...],
                  preferred_element_type=jnp.float32)            # (N, C) f32
    out_ref[0] = (out + bproj_ref[...]).astype(out_ref.dtype)


def _vmem_limit_bytes(B, N, C, H, x_dtype, attn_dtype):
    """Rough double-buffered footprint + f32 intermediates, with margin."""
    xb = jnp.dtype(x_dtype).itemsize
    ab = jnp.dtype(attn_dtype).itemsize
    io_blocks = 2 * (N * C * xb                 # x block
                     + N * C * xb               # out block
                     + H * N * N * ab           # attn block
                     + C * 3 * C * xb           # w_qkv
                     + C * C * xb               # w_proj
                     + C * 4)                   # bias (f32)
    interm = (N * 3 * C + N * C + 3 * N * N) * 4   # qkv, ctx, s/e/p in f32
    est = 2 * (io_blocks + interm)
    return int(min(48 * 1024 * 1024, max(8 * 1024 * 1024, est)))


def self_attention_pallas(x, w_qkv, w_proj, b_proj, num_heads):
    """x: (B, N, C); w_qkv: (3C, C) torch Linear weight; w_proj: (C, C); b_proj: (C,)."""
    B, N, C = x.shape
    H = num_heads
    hd = C // H
    scale = hd ** (-0.5)
    cdt = x.dtype

    # torch Linear computes x @ W.T; pre-transpose once in the wrapper and
    # cast weights to the compute dtype (bf16 in -> bf16 MXU operands).
    wqkv_t = w_qkv.T.astype(cdt)                 # (C, 3C)
    wproj_t = w_proj.T.astype(cdt)               # (C, C)
    bp = b_proj.reshape(1, C).astype(jnp.float32)

    kernel = partial(_self_attn_kernel, scale=scale, num_heads=H, head_dim=hd)

    out, attn = pl.pallas_call(
        kernel,
        out_shape=(
            jax.ShapeDtypeStruct((B, N, C), x.dtype),        # projected output
            jax.ShapeDtypeStruct((B, H, N, N), x.dtype),     # attention weights
        ),
        grid_spec=pltpu.PrefetchScalarGridSpec(
            num_scalar_prefetch=0,
            grid=(B,),                                        # one step per batch
            in_specs=[
                pl.BlockSpec((1, N, C), lambda b: (b, 0, 0)),     # x
                pl.BlockSpec((C, 3 * C), lambda b: (0, 0)),       # w_qkv (fused)
                pl.BlockSpec((C, C), lambda b: (0, 0)),           # w_proj
                pl.BlockSpec((1, C), lambda b: (0, 0)),           # proj bias
            ],
            out_specs=[
                pl.BlockSpec((1, N, C), lambda b: (b, 0, 0)),
                pl.BlockSpec((1, H, N, N), lambda b: (b, 0, 0, 0)),
            ],
        ),
        compiler_params=pltpu.CompilerParams(
            dimension_semantics=("parallel",),
            vmem_limit_bytes=_vmem_limit_bytes(B, N, C, H, x.dtype, x.dtype)),
    )(x, wqkv_t, wproj_t, bp)
    return out, attn


def self_attention_ref(x, w_qkv, w_proj, b_proj, num_heads):
    """Pure-JAX reference mirroring the PyTorch forward exactly (f32 math)."""
    B, N, C = x.shape
    H = num_heads
    hd = C // H
    scale = hd ** (-0.5)
    qkv = x @ w_qkv.T                                              # (B, N, 3C)
    qkv = qkv.reshape(B, N, 3, H, hd).transpose(2, 0, 3, 1, 4)
    q, k, v = qkv[0], qkv[1], qkv[2]
    attn = (q @ jnp.swapaxes(k, -2, -1)) * scale
    attn = jax.nn.softmax(attn, axis=-1)
    out = (attn @ v).transpose(0, 2, 1, 3).reshape(B, N, C)
    out = out @ w_proj.T + b_proj
    return out, attn


if __name__ == "__main__":
    B, N, C, H = 2, 8, 32, 8   # dim=32, heads=8, head_dim=4; qkv_bias=False

    key = jax.random.PRNGKey(0)
    kx, kqkv, kproj, kb = jax.random.split(key, 4)

    x = jax.random.normal(kx, (B, N, C), dtype=jnp.float32)
    w_qkv = 0.05 * jax.random.normal(kqkv, (3 * C, C), dtype=jnp.float32)   # Linear(dim, 3*dim, bias=False)
    w_proj = 0.05 * jax.random.normal(kproj, (C, C), dtype=jnp.float32)     # Linear(dim, dim)
    b_proj = 0.05 * jax.random.normal(kb, (C,), dtype=jnp.float32)

    # f32 path: exact-precision operands, tight tolerance vs reference.
    out, attn = jax.block_until_ready(
        self_attention_pallas(x, w_qkv, w_proj, b_proj, H))
    out_ref, attn_ref = self_attention_ref(x, w_qkv, w_proj, b_proj, H)
    assert out.shape == (B, N, C) and attn.shape == (B, H, N, N)
    assert jnp.allclose(out, out_ref, atol=1e-5, rtol=1e-5)
    assert jnp.allclose(attn, attn_ref, atol=1e-5, rtol=1e-5)

    # bf16 path: bf16 MXU operands with f32 accumulation, loose tolerance.
    xb = x.astype(jnp.bfloat16)
    out_b, attn_b = jax.block_until_ready(
        self_attention_pallas(xb, w_qkv, w_proj, b_proj, H))
    out_bref, attn_bref = self_attention_ref(
        xb.astype(jnp.float32), w_qkv, w_proj, b_proj, H)
    assert jnp.allclose(out_b.astype(jnp.float32), out_bref, atol=5e-2, rtol=5e-2)
    assert jnp.allclose(attn_b.astype(jnp.float32), attn_bref, atol=5e-2, rtol=5e-2)

    print("KERNEL_OK")
</pallas_src>

<mosaic_0001>
module attributes {stable_mosaic.version = 11 : i64} {
  func.func @_self_attn_kernel(%arg0: i32, %arg1: memref<1x8x32xf32, #tpu.memory_space<vmem>>, %arg2: memref<32x96xf32, #tpu.memory_space<vmem>>, %arg3: memref<32x32xf32, #tpu.memory_space<vmem>>, %arg4: memref<1x32xf32, #tpu.memory_space<vmem>>, %arg5: memref<1x8x32xf32, #tpu.memory_space<vmem>>, %arg6: memref<1x8x8x8xf32, #tpu.memory_space<vmem>>) attributes {dimension_semantics = [#tpu.dimension_semantics<parallel>], iteration_bounds = array<i64: 2>, scalar_prefetch = 0 : i64, scratch_operands = 0 : i64, tpu.core_type = #tpu.core_type<tc>, window_params = [{transform_indices = @transform_0, window_bounds = array<i64: 1, 8, 32>}, {pipeline_mode = #tpu.pipeline_mode<synchronous>, transform_indices = @transform_1, window_bounds = array<i64: 32, 96>}, {pipeline_mode = #tpu.pipeline_mode<synchronous>, transform_indices = @transform_2, window_bounds = array<i64: 32, 32>}, {pipeline_mode = #tpu.pipeline_mode<synchronous>, transform_indices = @transform_3, window_bounds = array<i64: 1, 32>}, {transform_indices = @transform_4, window_bounds = array<i64: 1, 8, 32>}, {transform_indices = @transform_5, window_bounds = array<i64: 1, 8, 8, 8>}]} {
    %c0 = arith.constant 0 : index
    %c0_0 = arith.constant 0 : index
    %c0_1 = arith.constant 0 : index
    %0 = vector.load %arg1[%c0, %c0_0, %c0_1] : memref<1x8x32xf32, #tpu.memory_space<vmem>>, vector<1x8x32xf32>
    %1 = vector.shape_cast %0 : vector<1x8x32xf32> to vector<8x32xf32>
    %c0_2 = arith.constant 0 : index
    %c0_3 = arith.constant 0 : index
    %2 = vector.load %arg2[%c0_2, %c0_3] : memref<32x96xf32, #tpu.memory_space<vmem>>, vector<32x96xf32>
    %cst = arith.constant dense<0.000000e+00> : vector<8x96xf32>
    %3 = tpu.matmul %1, %2, %cst {dimension_numbers = #tpu.dot_dimension_numbers<[1], [0], [0], [1], [0, 0, 1, 1], [], []>} : vector<8x32xf32>, vector<32x96xf32>, vector<8x96xf32> -> vector<8x96xf32>
    %4 = vector.extract_strided_slice %3 {offsets = [0, 0], sizes = [8, 4], strides = [1, 1]} : vector<8x96xf32> to vector<8x4xf32>
    %5 = vector.extract_strided_slice %3 {offsets = [0, 32], sizes = [8, 4], strides = [1, 1]} : vector<8x96xf32> to vector<8x4xf32>
    %6 = vector.extract_strided_slice %3 {offsets = [0, 64], sizes = [8, 4], strides = [1, 1]} : vector<8x96xf32> to vector<8x4xf32>
    %cst_4 = arith.constant dense<0.000000e+00> : vector<8x8xf32>
    %7 = tpu.matmul %4, %5, %cst_4 {dimension_numbers = #tpu.dot_dimension_numbers<[1], [1], [0], [0], [0, 0, 1, 0], [], []>} : vector<8x4xf32>, vector<8x4xf32>, vector<8x8xf32> -> vector<8x8xf32>
    %cst_5 = arith.constant 5.000000e-01 : f32
    %8 = vector.broadcast %cst_5 : f32 to vector<8x8xf32>
    %9 = arith.mulf %7, %8 : vector<8x8xf32>
    %cst_6 = arith.constant dense<0xFF800000> : vector<8xf32>
    %10 = vector.multi_reduction <maximumf>, %9, %cst_6 [1] : vector<8x8xf32> to vector<8xf32>
    %11 = vector.shape_cast %10 : vector<8xf32> to vector<8x1xf32>
    %12 = vector.broadcast %11 : vector<8x1xf32> to vector<8x8xf32>
    %13 = arith.subf %9, %12 : vector<8x8xf32>
    %14 = math.exp %13 : vector<8x8xf32>
    %cst_7 = arith.constant dense<0.000000e+00> : vector<8xf32>
    %15 = vector.multi_reduction <add>, %14, %cst_7 [1] : vector<8x8xf32> to vector<8xf32>
    %16 = vector.shape_cast %15 : vector<8xf32> to vector<8x1xf32>
    %17 = tpu.reciprocal %16 : vector<8x1xf32> -> vector<8x1xf32>
    %18 = vector.broadcast %17 : vector<8x1xf32> to vector<8x8xf32>
    %19 = arith.mulf %14, %18 : vector<8x8xf32>
    %c0_8 = arith.constant 0 : index
    %c0_9 = arith.constant 0 : index
    %c0_10 = arith.constant 0 : index
    %c0_11 = arith.constant 0 : index
    %20 = vector.load %arg6[%c0_8, %c0_9, %c0_10, %c0_11] : memref<1x8x8x8xf32, #tpu.memory_space<vmem>>, vector<1x1x8x8xf32>
    %21 = vector.shape_cast %20 : vector<1x1x8x8xf32> to vector<8x8xf32>
    %22 = vector.shape_cast %19 : vector<8x8xf32> to vector<1x1x8x8xf32>
    tpu.vector_store %arg6[%c0_8, %c0_9, %c0_10, %c0_11], %22 {strides = array<i32>} : memref<1x8x8x8xf32, #tpu.memory_space<vmem>>, vector<1x1x8x8xf32>,
    %cst_12 = arith.constant dense<0.000000e+00> : vector<8x4xf32>
    %23 = tpu.matmul %19, %6, %cst_12 {dimension_numbers = #tpu.dot_dimension_numbers<[1], [0], [0], [1], [0, 0, 1, 1], [], []>} : vector<8x8xf32>, vector<8x4xf32>, vector<8x4xf32> -> vector<8x4xf32>
    %24 = vector.extract_strided_slice %3 {offsets = [0, 4], sizes = [8, 4], strides = [1, 1]} : vector<8x96xf32> to vector<8x4xf32>
    %25 = vector.extract_strided_slice %3 {offsets = [0, 36], sizes = [8, 4], strides = [1, 1]} : vector<8x96xf32> to vector<8x4xf32>
    %26 = vector.extract_strided_slice %3 {offsets = [0, 68], sizes = [8, 4], strides = [1, 1]} : vector<8x96xf32> to vector<8x4xf32>
    %cst_13 = arith.constant dense<0.000000e+00> : vector<8x8xf32>
    %27 = tpu.matmul %24, %25, %cst_13 {dimension_numbers = #tpu.dot_dimension_numbers<[1], [1], [0], [0], [0, 0, 1, 0], [], []>} : vector<8x4xf32>, vector<8x4xf32>, vector<8x8xf32> -> vector<8x8xf32>
    %cst_14 = arith.constant 5.000000e-01 : f32
    %28 = vector.broadcast %cst_14 : f32 to vector<8x8xf32>
    %29 = arith.mulf %27, %28 : vector<8x8xf32>
    %cst_15 = arith.constant dense<0xFF800000> : vector<8xf32>
    %30 = vector.multi_reduction <maximumf>, %29, %cst_15 [1] : vector<8x8xf32> to vector<8xf32>
    %31 = vector.shape_cast %30 : vector<8xf32> to vector<8x1xf32>
    %32 = vector.broadcast %31 : vector<8x1xf32> to vector<8x8xf32>
    %33 = arith.subf %29, %32 : vector<8x8xf32>
    %34 = math.exp %33 : vector<8x8xf32>
    %cst_16 = arith.constant dense<0.000000e+00> : vector<8xf32>
    %35 = vector.multi_reduction <add>, %34, %cst_16 [1] : vector<8x8xf32> to vector<8xf32>
    %36 = vector.shape_cast %35 : vector<8xf32> to vector<8x1xf32>
    %37 = tpu.reciprocal %36 : vector<8x1xf32> -> vector<8x1xf32>
    %38 = vector.broadcast %37 : vector<8x1xf32> to vector<8x8xf32>
    %39 = arith.mulf %34, %38 : vector<8x8xf32>
    %c0_17 = arith.constant 0 : index
    %c1 = arith.constant 1 : index
    %c0_18 = arith.constant 0 : index
    %c0_19 = arith.constant 0 : index
    %40 = vector.load %arg6[%c0_17, %c1, %c0_18, %c0_19] : memref<1x8x8x8xf32, #tpu.memory_space<vmem>>, vector<1x1x8x8xf32>
    %41 = vector.shape_cast %40 : vector<1x1x8x8xf32> to vector<8x8xf32>
    %42 = vector.shape_cast %39 : vector<8x8xf32> to vector<1x1x8x8xf32>
    tpu.vector_store %arg6[%c0_17, %c1, %c0_18, %c0_19], %42 {strides = array<i32>} : memref<1x8x8x8xf32, #tpu.memory_space<vmem>>, vector<1x1x8x8xf32>,
    %cst_20 = arith.constant dense<0.000000e+00> : vector<8x4xf32>
    %43 = tpu.matmul %39, %26, %cst_20 {dimension_numbers = #tpu.dot_dimension_numbers<[1], [0], [0], [1], [0, 0, 1, 1], [], []>} : vector<8x8xf32>, vector<8x4xf32>, vector<8x4xf32> -> vector<8x4xf32>
    %44 = vector.extract_strided_slice %3 {offsets = [0, 8], sizes = [8, 4], strides = [1, 1]} : vector<8x96xf32> to vector<8x4xf32>
    %45 = vector.extract_strided_slice %3 {offsets = [0, 40], sizes = [8, 4], strides = [1, 1]} : vector<8x96xf32> to vector<8x4xf32>
    %46 = vector.extract_strided_slice %3 {offsets = [0, 72], sizes = [8, 4], strides = [1, 1]} : vector<8x96xf32> to vector<8x4xf32>
    %cst_21 = arith.constant dense<0.000000e+00> : vector<8x8xf32>
    %47 = tpu.matmul %44, %45, %cst_21 {dimension_numbers = #tpu.dot_dimension_numbers<[1], [1], [0], [0], [0, 0, 1, 0], [], []>} : vector<8x4xf32>, vector<8x4xf32>, vector<8x8xf32> -> vector<8x8xf32>
    %cst_22 = arith.constant 5.000000e-01 : f32
    %48 = vector.broadcast %cst_22 : f32 to vector<8x8xf32>
    %49 = arith.mulf %47, %48 : vector<8x8xf32>
    %cst_23 = arith.constant dense<0xFF800000> : vector<8xf32>
    %50 = vector.multi_reduction <maximumf>, %49, %cst_23 [1] : vector<8x8xf32> to vector<8xf32>
    %51 = vector.shape_cast %50 : vector<8xf32> to vector<8x1xf32>
    %52 = vector.broadcast %51 : vector<8x1xf32> to vector<8x8xf32>
    %53 = arith.subf %49, %52 : vector<8x8xf32>
    %54 = math.exp %53 : vector<8x8xf32>
    %cst_24 = arith.constant dense<0.000000e+00> : vector<8xf32>
    %55 = vector.multi_reduction <add>, %54, %cst_24 [1] : vector<8x8xf32> to vector<8xf32>
    %56 = vector.shape_cast %55 : vector<8xf32> to vector<8x1xf32>
    %57 = tpu.reciprocal %56 : vector<8x1xf32> -> vector<8x1xf32>
    %58 = vector.broadcast %57 : vector<8x1xf32> to vector<8x8xf32>
    %59 = arith.mulf %54, %58 : vector<8x8xf32>
    %c0_25 = arith.constant 0 : index
    %c2 = arith.constant 2 : index
    %c0_26 = arith.constant 0 : index
    %c0_27 = arith.constant 0 : index
    %60 = vector.load %arg6[%c0_25, %c2, %c0_26, %c0_27] : memref<1x8x8x8xf32, #tpu.memory_space<vmem>>, vector<1x1x8x8xf32>
    %61 = vector.shape_cast %60 : vector<1x1x8x8xf32> to vector<8x8xf32>
    %62 = vector.shape_cast %59 : vector<8x8xf32> to vector<1x1x8x8xf32>
    tpu.vector_store %arg6[%c0_25, %c2, %c0_26, %c0_27], %62 {strides = array<i32>} : memref<1x8x8x8xf32, #tpu.memory_space<vmem>>, vector<1x1x8x8xf32>,
    %cst_28 = arith.constant dense<0.000000e+00> : vector<8x4xf32>
    %63 = tpu.matmul %59, %46, %cst_28 {dimension_numbers = #tpu.dot_dimension_numbers<[1], [0], [0], [1], [0, 0, 1, 1], [], []>} : vector<8x8xf32>, vector<8x4xf32>, vector<8x4xf32> -> vector<8x4xf32>
    %64 = vector.extract_strided_slice %3 {offsets = [0, 12], sizes = [8, 4], strides = [1, 1]} : vector<8x96xf32> to vector<8x4xf32>
    %65 = vector.extract_strided_slice %3 {offsets = [0, 44], sizes = [8, 4], strides = [1, 1]} : vector<8x96xf32> to vector<8x4xf32>
    %66 = vector.extract_strided_slice %3 {offsets = [0, 76], sizes = [8, 4], strides = [1, 1]} : vector<8x96xf32> to vector<8x4xf32>
    %cst_29 = arith.constant dense<0.000000e+00> : vector<8x8xf32>
    %67 = tpu.matmul %64, %65, %cst_29 {dimension_numbers = #tpu.dot_dimension_numbers<[1], [1], [0], [0], [0, 0, 1, 0], [], []>} : vector<8x4xf32>, vector<8x4xf32>, vector<8x8xf32> -> vector<8x8xf32>
    %cst_30 = arith.constant 5.000000e-01 : f32
    %68 = vector.broadcast %cst_30 : f32 to vector<8x8xf32>
    %69 = arith.mulf %67, %68 : vector<8x8xf32>
    %cst_31 = arith.constant dense<0xFF800000> : vector<8xf32>
    %70 = vector.multi_reduction <maximumf>, %69, %cst_31 [1] : vector<8x8xf32> to vector<8xf32>
    %71 = vector.shape_cast %70 : vector<8xf32> to vector<8x1xf32>
    %72 = vector.broadcast %71 : vector<8x1xf32> to vector<8x8xf32>
    %73 = arith.subf %69, %72 : vector<8x8xf32>
    %74 = math.exp %73 : vector<8x8xf32>
    %cst_32 = arith.constant dense<0.000000e+00> : vector<8xf32>
    %75 = vector.multi_reduction <add>, %74, %cst_32 [1] : vector<8x8xf32> to vector<8xf32>
    %76 = vector.shape_cast %75 : vector<8xf32> to vector<8x1xf32>
    %77 = tpu.reciprocal %76 : vector<8x1xf32> -> vector<8x1xf32>
    %78 = vector.broadcast %77 : vector<8x1xf32> to vector<8x8xf32>
    %79 = arith.mulf %74, %78 : vector<8x8xf32>
    %c0_33 = arith.constant 0 : index
    %c3 = arith.constant 3 : index
    %c0_34 = arith.constant 0 : index
    %c0_35 = arith.constant 0 : index
    %80 = vector.load %arg6[%c0_33, %c3, %c0_34, %c0_35] : memref<1x8x8x8xf32, #tpu.memory_space<vmem>>, vector<1x1x8x8xf32>
    %81 = vector.shape_cast %80 : vector<1x1x8x8xf32> to vector<8x8xf32>
    %82 = vector.shape_cast %79 : vector<8x8xf32> to vector<1x1x8x8xf32>
    tpu.vector_store %arg6[%c0_33, %c3, %c0_34, %c0_35], %82 {strides = array<i32>} : memref<1x8x8x8xf32, #tpu.memory_space<vmem>>, vector<1x1x8x8xf32>,
    %cst_36 = arith.constant dense<0.000000e+00> : vector<8x4xf32>
    %83 = tpu.matmul %79, %66, %cst_36 {dimension_numbers = #tpu.dot_dimension_numbers<[1], [0], [0], [1], [0, 0, 1, 1], [], []>} : vector<8x8xf32>, vector<8x4xf32>, vector<8x4xf32> -> vector<8x4xf32>
    %84 = vector.extract_strided_slice %3 {offsets = [0, 16], sizes = [8, 4], strides = [1, 1]} : vector<8x96xf32> to vector<8x4xf32>
    %85 = vector.extract_strided_slice %3 {offsets = [0, 48], sizes = [8, 4], strides = [1, 1]} : vector<8x96xf32> to vector<8x4xf32>
    %86 = vector.extract_strided_slice %3 {offsets = [0, 80], sizes = [8, 4], strides = [1, 1]} : vector<8x96xf32> to vector<8x4xf32>
    %cst_37 = arith.constant dense<0.000000e+00> : vector<8x8xf32>
    %87 = tpu.matmul %84, %85, %cst_37 {dimension_numbers = #tpu.dot_dimension_numbers<[1], [1], [0], [0], [0, 0, 1, 0], [], []>} : vector<8x4xf32>, vector<8x4xf32>, vector<8x8xf32> -> vector<8x8xf32>
    %cst_38 = arith.constant 5.000000e-01 : f32
    %88 = vector.broadcast %cst_38 : f32 to vector<8x8xf32>
    %89 = arith.mulf %87, %88 : vector<8x8xf32>
    %cst_39 = arith.constant dense<0xFF800000> : vector<8xf32>
    %90 = vector.multi_reduction <maximumf>, %89, %cst_39 [1] : vector<8x8xf32> to vector<8xf32>
    %91 = vector.shape_cast %90 : vector<8xf32> to vector<8x1xf32>
    %92 = vector.broadcast %91 : vector<8x1xf32> to vector<8x8xf32>
    %93 = arith.subf %89, %92 : vector<8x8xf32>
    %94 = math.exp %93 : vector<8x8xf32>
    %cst_40 = arith.constant dense<0.000000e+00> : vector<8xf32>
    %95 = vector.multi_reduction <add>, %94, %cst_40 [1] : vector<8x8xf32> to vector<8xf32>
    %96 = vector.shape_cast %95 : vector<8xf32> to vector<8x1xf32>
    %97 = tpu.reciprocal %96 : vector<8x1xf32> -> vector<8x1xf32>
    %98 = vector.broadcast %97 : vector<8x1xf32> to vector<8x8xf32>
    %99 = arith.mulf %94, %98 : vector<8x8xf32>
    %c0_41 = arith.constant 0 : index
    %c4 = arith.constant 4 : index
    %c0_42 = arith.constant 0 : index
    %c0_43 = arith.constant 0 : index
    %100 = vector.load %arg6[%c0_41, %c4, %c0_42, %c0_43] : memref<1x8x8x8xf32, #tpu.memory_space<vmem>>, vector<1x1x8x8xf32>
    %101 = vector.shape_cast %100 : vector<1x1x8x8xf32> to vector<8x8xf32>
    %102 = vector.shape_cast %99 : vector<8x8xf32> to vector<1x1x8x8xf32>
    tpu.vector_store %arg6[%c0_41, %c4, %c0_42, %c0_43], %102 {strides = array<i32>} : memref<1x8x8x8xf32, #tpu.memory_space<vmem>>, vector<1x1x8x8xf32>,
    %cst_44 = arith.constant dense<0.000000e+00> : vector<8x4xf32>
    %103 = tpu.matmul %99, %86, %cst_44 {dimension_numbers = #tpu.dot_dimension_numbers<[1], [0], [0], [1], [0, 0, 1, 1], [], []>} : vector<8x8xf32>, vector<8x4xf32>, vector<8x4xf32> -> vector<8x4xf32>
    %104 = vector.extract_strided_slice %3 {offsets = [0, 20], sizes = [8, 4], strides = [1, 1]} : vector<8x96xf32> to vector<8x4xf32>
    %105 = vector.extract_strided_slice %3 {offsets = [0, 52], sizes = [8, 4], strides = [1, 1]} : vector<8x96xf32> to vector<8x4xf32>
    %106 = vector.extract_strided_slice %3 {offsets = [0, 84], sizes = [8, 4], strides = [1, 1]} : vector<8x96xf32> to vector<8x4xf32>
    %cst_45 = arith.constant dense<0.000000e+00> : vector<8x8xf32>
    %107 = tpu.matmul %104, %105, %cst_45 {dimension_numbers = #tpu.dot_dimension_numbers<[1], [1], [0], [0], [0, 0, 1, 0], [], []>} : vector<8x4xf32>, vector<8x4xf32>, vector<8x8xf32> -> vector<8x8xf32>
    %cst_46 = arith.constant 5.000000e-01 : f32
    %108 = vector.broadcast %cst_46 : f32 to vector<8x8xf32>
    %109 = arith.mulf %107, %108 : vector<8x8xf32>
    %cst_47 = arith.constant dense<0xFF800000> : vector<8xf32>
    %110 = vector.multi_reduction <maximumf>, %109, %cst_47 [1] : vector<8x8xf32> to vector<8xf32>
    %111 = vector.shape_cast %110 : vector<8xf32> to vector<8x1xf32>
    %112 = vector.broadcast %111 : vector<8x1xf32> to vector<8x8xf32>
    %113 = arith.subf %109, %112 : vector<8x8xf32>
    %114 = math.exp %113 : vector<8x8xf32>
    %cst_48 = arith.constant dense<0.000000e+00> : vector<8xf32>
    %115 = vector.multi_reduction <add>, %114, %cst_48 [1] : vector<8x8xf32> to vector<8xf32>
    %116 = vector.shape_cast %115 : vector<8xf32> to vector<8x1xf32>
    %117 = tpu.reciprocal %116 : vector<8x1xf32> -> vector<8x1xf32>
    %118 = vector.broadcast %117 : vector<8x1xf32> to vector<8x8xf32>
    %119 = arith.mulf %114, %118 : vector<8x8xf32>
    %c0_49 = arith.constant 0 : index
    %c5 = arith.constant 5 : index
    %c0_50 = arith.constant 0 : index
    %c0_51 = arith.constant 0 : index
    %120 = vector.load %arg6[%c0_49, %c5, %c0_50, %c0_51] : memref<1x8x8x8xf32, #tpu.memory_space<vmem>>, vector<1x1x8x8xf32>
    %121 = vector.shape_cast %120 : vector<1x1x8x8xf32> to vector<8x8xf32>
    %122 = vector.shape_cast %119 : vector<8x8xf32> to vector<1x1x8x8xf32>
    tpu.vector_store %arg6[%c0_49, %c5, %c0_50, %c0_51], %122 {strides = array<i32>} : memref<1x8x8x8xf32, #tpu.memory_space<vmem>>, vector<1x1x8x8xf32>,
    %cst_52 = arith.constant dense<0.000000e+00> : vector<8x4xf32>
    %123 = tpu.matmul %119, %106, %cst_52 {dimension_numbers = #tpu.dot_dimension_numbers<[1], [0], [0], [1], [0, 0, 1, 1], [], []>} : vector<8x8xf32>, vector<8x4xf32>, vector<8x4xf32> -> vector<8x4xf32>
    %124 = vector.extract_strided_slice %3 {offsets = [0, 24], sizes = [8, 4], strides = [1, 1]} : vector<8x96xf32> to vector<8x4xf32>
    %125 = vector.extract_strided_slice %3 {offsets = [0, 56], sizes = [8, 4], strides = [1, 1]} : vector<8x96xf32> to vector<8x4xf32>
    %126 = vector.extract_strided_slice %3 {offsets = [0, 88], sizes = [8, 4], strides = [1, 1]} : vector<8x96xf32> to vector<8x4xf32>
    %cst_53 = arith.constant dense<0.000000e+00> : vector<8x8xf32>
    %127 = tpu.matmul %124, %125, %cst_53 {dimension_numbers = #tpu.dot_dimension_numbers<[1], [1], [0], [0], [0, 0, 1, 0], [], []>} : vector<8x4xf32>, vector<8x4xf32>, vector<8x8xf32> -> vector<8x8xf32>
    %cst_54 = arith.constant 5.000000e-01 : f32
    %128 = vector.broadcast %cst_54 : f32 to vector<8x8xf32>
    %129 = arith.mulf %127, %128 : vector<8x8xf32>
    %cst_55 = arith.constant dense<0xFF800000> : vector<8xf32>
    %130 = vector.multi_reduction <maximumf>, %129, %cst_55 [1] : vector<8x8xf32> to vector<8xf32>
    %131 = vector.shape_cast %130 : vector<8xf32> to vector<8x1xf32>
    %132 = vector.broadcast %131 : vector<8x1xf32> to vector<8x8xf32>
    %133 = arith.subf %129, %132 : vector<8x8xf32>
    %134 = math.exp %133 : vector<8x8xf32>
    %cst_56 = arith.constant dense<0.000000e+00> : vector<8xf32>
    %135 = vector.multi_reduction <add>, %134, %cst_56 [1] : vector<8x8xf32> to vector<8xf32>
    %136 = vector.shape_cast %135 : vector<8xf32> to vector<8x1xf32>
    %137 = tpu.reciprocal %136 : vector<8x1xf32> -> vector<8x1xf32>
    %138 = vector.broadcast %137 : vector<8x1xf32> to vector<8x8xf32>
    %139 = arith.mulf %134, %138 : vector<8x8xf32>
    %c0_57 = arith.constant 0 : index
    %c6 = arith.constant 6 : index
    %c0_58 = arith.constant 0 : index
    %c0_59 = arith.constant 0 : index
    %140 = vector.load %arg6[%c0_57, %c6, %c0_58, %c0_59] : memref<1x8x8x8xf32, #tpu.memory_space<vmem>>, vector<1x1x8x8xf32>
    %141 = vector.shape_cast %140 : vector<1x1x8x8xf32> to vector<8x8xf32>
    %142 = vector.shape_cast %139 : vector<8x8xf32> to vector<1x1x8x8xf32>
    tpu.vector_store %arg6[%c0_57, %c6, %c0_58, %c0_59], %142 {strides = array<i32>} : memref<1x8x8x8xf32, #tpu.memory_space<vmem>>, vector<1x1x8x8xf32>,
    %cst_60 = arith.constant dense<0.000000e+00> : vector<8x4xf32>
    %143 = tpu.matmul %139, %126, %cst_60 {dimension_numbers = #tpu.dot_dimension_numbers<[1], [0], [0], [1], [0, 0, 1, 1], [], []>} : vector<8x8xf32>, vector<8x4xf32>, vector<8x4xf32> -> vector<8x4xf32>
    %144 = vector.extract_strided_slice %3 {offsets = [0, 28], sizes = [8, 4], strides = [1, 1]} : vector<8x96xf32> to vector<8x4xf32>
    %145 = vector.extract_strided_slice %3 {offsets = [0, 60], sizes = [8, 4], strides = [1, 1]} : vector<8x96xf32> to vector<8x4xf32>
    %146 = vector.extract_strided_slice %3 {offsets = [0, 92], sizes = [8, 4], strides = [1, 1]} : vector<8x96xf32> to vector<8x4xf32>
    %cst_61 = arith.constant dense<0.000000e+00> : vector<8x8xf32>
    %147 = tpu.matmul %144, %145, %cst_61 {dimension_numbers = #tpu.dot_dimension_numbers<[1], [1], [0], [0], [0, 0, 1, 0], [], []>} : vector<8x4xf32>, vector<8x4xf32>, vector<8x8xf32> -> vector<8x8xf32>
    %cst_62 = arith.constant 5.000000e-01 : f32
    %148 = vector.broadcast %cst_62 : f32 to vector<8x8xf32>
    %149 = arith.mulf %147, %148 : vector<8x8xf32>
    %cst_63 = arith.constant dense<0xFF800000> : vector<8xf32>
    %150 = vector.multi_reduction <maximumf>, %149, %cst_63 [1] : vector<8x8xf32> to vector<8xf32>
    %151 = vector.shape_cast %150 : vector<8xf32> to vector<8x1xf32>
    %152 = vector.broadcast %151 : vector<8x1xf32> to vector<8x8xf32>
    %153 = arith.subf %149, %152 : vector<8x8xf32>
    %154 = math.exp %153 : vector<8x8xf32>
    %cst_64 = arith.constant dense<0.000000e+00> : vector<8xf32>
    %155 = vector.multi_reduction <add>, %154, %cst_64 [1] : vector<8x8xf32> to vector<8xf32>
    %156 = vector.shape_cast %155 : vector<8xf32> to vector<8x1xf32>
    %157 = tpu.reciprocal %156 : vector<8x1xf32> -> vector<8x1xf32>
    %158 = vector.broadcast %157 : vector<8x1xf32> to vector<8x8xf32>
    %159 = arith.mulf %154, %158 : vector<8x8xf32>
    %c0_65 = arith.constant 0 : index
    %c7 = arith.constant 7 : index
    %c0_66 = arith.constant 0 : index
    %c0_67 = arith.constant 0 : index
    %160 = vector.load %arg6[%c0_65, %c7, %c0_66, %c0_67] : memref<1x8x8x8xf32, #tpu.memory_space<vmem>>, vector<1x1x8x8xf32>
    %161 = vector.shape_cast %160 : vector<1x1x8x8xf32> to vector<8x8xf32>
    %162 = vector.shape_cast %159 : vector<8x8xf32> to vector<1x1x8x8xf32>
    tpu.vector_store %arg6[%c0_65, %c7, %c0_66, %c0_67], %162 {strides = array<i32>} : memref<1x8x8x8xf32, #tpu.memory_space<vmem>>, vector<1x1x8x8xf32>,
    %cst_68 = arith.constant dense<0.000000e+00> : vector<8x4xf32>
    %163 = tpu.matmul %159, %146, %cst_68 {dimension_numbers = #tpu.dot_dimension_numbers<[1], [0], [0], [1], [0, 0, 1, 1], [], []>} : vector<8x8xf32>, vector<8x4xf32>, vector<8x4xf32> -> vector<8x4xf32>
    %164 = tpu.concatenate %23, %43, %63, %83, %103, %123, %143, %163 in 1 : vector<8x4xf32>, vector<8x4xf32>, vector<8x4xf32>, vector<8x4xf32>, vector<8x4xf32>, vector<8x4xf32>, vector<8x4xf32>, vector<8x4xf32> -> vector<8x32xf32>
    %c0_69 = arith.constant 0 : index
    %c0_70 = arith.constant 0 : index
    %165 = vector.load %arg3[%c0_69, %c0_70] : memref<32x32xf32, #tpu.memory_space<vmem>>, vector<32x32xf32>
    %cst_71 = arith.constant dense<0.000000e+00> : vector<8x32xf32>
    %166 = tpu.matmul %164, %165, %cst_71 {dimension_numbers = #tpu.dot_dimension_numbers<[1], [0], [0], [1], [0, 0, 1, 1], [], []>} : vector<8x32xf32>, vector<32x32xf32>, vector<8x32xf32> -> vector<8x32xf32>
    %c0_72 = arith.constant 0 : index
    %c0_73 = arith.constant 0 : index
    %167 = vector.load %arg4[%c0_72, %c0_73] : memref<1x32xf32, #tpu.memory_space<vmem>>, vector<1x32xf32>
    %168 = vector.broadcast %167 : vector<1x32xf32> to vector<8x32xf32>
    %169 = arith.addf %166, %168 : vector<8x32xf32>
    %c0_74 = arith.constant 0 : index
    %c0_75 = arith.constant 0 : index
    %c0_76 = arith.constant 0 : index
    %170 = vector.load %arg5[%c0_74, %c0_75, %c0_76] : memref<1x8x32xf32, #tpu.memory_space<vmem>>, vector<1x8x32xf32>
    %171 = vector.shape_cast %170 : vector<1x8x32xf32> to vector<8x32xf32>
    %172 = vector.shape_cast %169 : vector<8x32xf32> to vector<1x8x32xf32>
    tpu.vector_store %arg5[%c0_74, %c0_75, %c0_76], %172 {strides = array<i32>} : memref<1x8x32xf32, #tpu.memory_space<vmem>>, vector<1x8x32xf32>,
    return
  }
  func.func @transform_0(%arg0: i32) -> (i32, i32, i32) {
    %c0_i32 = arith.constant 0 : i32
    %c0_i32_0 = arith.constant 0 : i32
    %c0_i32_1 = arith.constant 0 : i32
    return %arg0, %c0_i32, %c0_i32_0 : i32, i32, i32
  }
  func.func @transform_1(%arg0: i32) -> (i32, i32) {
    %c0_i32 = arith.constant 0 : i32
    %c0_i32_0 = arith.constant 0 : i32
    %c0_i32_1 = arith.constant 0 : i32
    return %c0_i32, %c0_i32_0 : i32, i32
  }
  func.func @transform_2(%arg0: i32) -> (i32, i32) {
    %c0_i32 = arith.constant 0 : i32
    %c0_i32_0 = arith.constant 0 : i32
    %c0_i32_1 = arith.constant 0 : i32
    return %c0_i32, %c0_i32_0 : i32, i32
  }
  func.func @transform_3(%arg0: i32) -> (i32, i32) {
    %c0_i32 = arith.constant 0 : i32
    %c0_i32_0 = arith.constant 0 : i32
    %c0_i32_1 = arith.constant 0 : i32
    return %c0_i32, %c0_i32_0 : i32, i32
  }
  func.func @transform_4(%arg0: i32) -> (i32, i32, i32) {
    %c0_i32 = arith.constant 0 : i32
    %c0_i32_0 = arith.constant 0 : i32
    %c0_i32_1 = arith.constant 0 : i32
    return %arg0, %c0_i32, %c0_i32_0 : i32, i32, i32
  }
  func.func @transform_5(%arg0: i32) -> (i32, i32, i32, i32) {
    %c0_i32 = arith.constant 0 : i32
    %c0_i32_0 = arith.constant 0 : i32
    %c0_i32_1 = arith.constant 0 : i32
    %c0_i32_2 = arith.constant 0 : i32
    return %arg0, %c0_i32, %c0_i32_0, %c0_i32_1 : i32, i32, i32, i32
  }
}

</mosaic_0001>

<llo_original>
// kernel: tpu_custom_call.1
$region0: #{tpu_custom_call.1}
  #allocation0 [shape = 'u32[]', space=smem, size = 0x4, offset = 0x4, fixed_abs, tag = 'smem constant byte address 0x4 - core index']
  #allocation1 [shape = 'u32[144,128]{1,0:T(1,128)}', space=vmem, size = 0x12000, scoped, tag = 'internal scratch']
  %s0 = inlined_call_operand.hbm [shape: f32[2,8,32], index: 0, kind: input, shape index: {}]
  %s1 = inlined_call_operand.hbm [shape: f32[32,96], index: 1, kind: input, shape index: {}]
  %s2 = inlined_call_operand.hbm [shape: f32[32,32], index: 2, kind: input, shape index: {}]
  %s3 = inlined_call_operand.vmem [shape: f32[1,32], index: 3, kind: input, shape index: {}]
  %s4 = inlined_call_operand.hbm [shape: f32[2,8,32], index: 4, kind: output, shape index: {0}]
  %s5 = inlined_call_operand.hbm [shape: f32[2,8,8,8], index: 5, kind: output, shape index: {1}]
  %6 = xla_tuple %s4, %s5
  %s7 = sld [smem:[#allocation0]]
  $region69: #{tpu_custom_call.1} parent=0
    _
  %s9 = ssub.s32 1, %s7
  %s10 = scalar_select 0, %s9, %s7
  $region1: #{tpu_custom_call.1} parent=0
    #allocation2 [shape = 'u8[8192]{0}', space=vmem, size = 0x2000, scoped, tag = 'input window, operand 0']
    #allocation3 [shape = 's32[2]{0}', space=sflag, size = 0x8, scoped, tag = 'scoped memory for tpu_custom_call.1']
    #allocation4 [shape = 's32[2]{0}', space=sflag, size = 0x8, scoped, tag = 'scoped memory for tpu_custom_call.1']
    #allocation5 [shape = 'u8[16384]{0}', space=vmem, size = 0x4000, scoped, tag = 'input window, operand 1, single buffered']
    #allocation6 [shape = 's32[1]{0}', space=sflag, size = 0x4, scoped, tag = 'scoped memory for tpu_custom_call.1']
    #allocation7 [shape = 'u8[16384]{0}', space=vmem, size = 0x4000, scoped, tag = 'input window, operand 2, single buffered']
    #allocation8 [shape = 'u8[8192]{0}', space=vmem, size = 0x2000, scoped, tag = 'output window, operand 0']
    #allocation9 [shape = 'u8[65536]{0}', space=vmem, size = 0x10000, scoped, tag = 'output window, operand 1']
    #allocation10 [shape = 's32[2]{0}', space=sflag, size = 0x8, scoped, tag = 'scoped memory for tpu_custom_call.1']
    %11 = vsyncpa [#allocation3], 0
    %s12 = scalar_lea.sflag [#allocation3], 1
    %13 = vsyncpa %s12, 0
    %14 = vsyncpa [#allocation6], 0
    %15 = vsyncpa [#allocation4], 0
    %s16 = scalar_lea.sflag [#allocation4], 1
    %17 = vsyncpa %s16, 0
    %18 = vsyncpa [#allocation10], 0
    %s19 = scalar_lea.sflag [#allocation10], 1
    %20 = vsyncpa %s19, 0
    loop: start=0, step=1, limit=4
    $region2: #{tpu_custom_call.1} parent=1 // loop_pre_header
      _
    $region3: #{tpu_custom_call.1} parent=1 // loop_header
      %s22 = sphi 0, %s26
      %p23 = scmp.ge.s32.totalorder %s22, 4
      %s32 = sphi 0, %s34
      %s35 = sphi 0, %s32
      %s36 = sphi 0, %s35
      %s52 = sphi 0, %s36
      %s56 = sphi 0, %s56
      %s58 = sphi 0, %s56
      %s59 = sphi 0, %s58
      %s73 = sphi 0, %s59
      %s77 = sphi 0, %s77
      %s79 = sphi 0, %s77
      %s80 = sphi 0, %s79
      %s94 = sphi 0, %s80
      %s98 = sphi 0, %s98
      %s100 = sphi 0, %s98
      %s101 = sphi 0, %s100
      %s115 = sphi 0, %s101
      %s121 = sphi 0, %s123
      %s124 = sphi 0, %s121
      %s125 = sphi 0, %s124
      %s141 = sphi 0, %s125
      %s147 = sphi 0, %s149
      %s150 = sphi 0, %s147
      %s151 = sphi 0, %s150
      %s167 = sphi 0, %s151
    $region4: #{tpu_custom_call.1} parent=1 // loop_header_branch
      %25 = sbr.rel (%p23) target = $region8
    $region5: #{tpu_custom_call.1} parent=1 // loop_body
      %s27 = ssub.s32 %s22, 1
      %s28 = ssub.s32 %s22, 2
      %s29 = sadd.s32 %s22, 1
      %s30 = ssub.s32 %s22, %s29
      %p31 = scmp.eq.s32.totalorder %s30, 0
      %s33 = sadd.s32 %s32, 1
      %s34 = scalar_select %p31, %s32, %s33
      %p37 = pneg %p31
      %p38 = scmp.eq.s32.totalorder %s22, 1
      %p39 = por %p37, %p38
      %p40 = scmp.ne.s32.totalorder %s32, %s35
      %p41 = scmp.eq.s32.totalorder %s22, 0
      %p42 = por %p40, %p41
      %p43 = scmp.ne.s32.totalorder %s32, %s35
      %p44 = scmp.eq.s32.totalorder %s27, 1
      %p45 = por %p43, %p44
      %p46 = scmp.ne.s32.totalorder %s35, %s36
      %p47 = scmp.eq.s32.totalorder %s27, 0
      %p48 = por %p46, %p47
      %p49 = scmp.ne.s32.totalorder %s35, %s36
      %p50 = scmp.eq.s32.totalorder %s28, 1
      %p51 = por %p49, %p50
      %p53 = scmp.ne.s32.totalorder %s36, %s52
      %p54 = scmp.eq.s32.totalorder %s28, 0
      %p55 = por %p53, %p54
      %s57 = sadd.s32 %s56, 1
      %p60 = scmp.eq.s32.totalorder %s22, 1
      %p61 = scmp.ne.s32.totalorder %s56, %s58
      %p62 = scmp.eq.s32.totalorder %s22, 0
      %p63 = por %p61, %p62
      %p64 = scmp.ne.s32.totalorder %s56, %s58
      %p65 = scmp.eq.s32.totalorder %s27, 1
      %p66 = por %p64, %p65
      %p67 = scmp.ne.s32.totalorder %s58, %s59
      %p68 = scmp.eq.s32.totalorder %s27, 0
      %p69 = por %p67, %p68
      %p70 = scmp.ne.s32.totalorder %s58, %s59
      %p71 = scmp.eq.s32.totalorder %s28, 1
      %p72 = por %p70, %p71
      %p74 = scmp.ne.s32.totalorder %s59, %s73
      %p75 = scmp.eq.s32.totalorder %s28, 0
      %p76 = por %p74, %p75
      %s78 = sadd.s32 %s77, 1
      %p81 = scmp.eq.s32.totalorder %s22, 1
      %p82 = scmp.ne.s32.totalorder %s77, %s79
      %p83 = scmp.eq.s32.totalorder %s22, 0
      %p84 = por %p82, %p83
      %p85 = scmp.ne.s32.totalorder %s77, %s79
      %p86 = scmp.eq.s32.totalorder %s27, 1
      %p87 = por %p85, %p86
      %p88 = scmp.ne.s32.totalorder %s79, %s80
      %p89 = scmp.eq.s32.totalorder %s27, 0
      %p90 = por %p88, %p89
      %p91 = scmp.ne.s32.totalorder %s79, %s80
      %p92 = scmp.eq.s32.totalorder %s28, 1
      %p93 = por %p91, %p92
      %p95 = scmp.ne.s32.totalorder %s80, %s94
      %p96 = scmp.eq.s32.totalorder %s28, 0
      %p97 = por %p95, %p96
      %s99 = sadd.s32 %s98, 1
      %p102 = scmp.eq.s32.totalorder %s22, 1
      %p103 = scmp.ne.s32.totalorder %s98, %s100
      %p104 = scmp.eq.s32.totalorder %s22, 0
      %p105 = por %p103, %p104
      %p106 = scmp.ne.s32.totalorder %s98, %s100
      %p107 = scmp.eq.s32.totalorder %s27, 1
      %p108 = por %p106, %p107
      %p109 = scmp.ne.s32.totalorder %s100, %s101
      %p110 = scmp.eq.s32.totalorder %s27, 0
      %p111 = por %p109, %p110
      %p112 = scmp.ne.s32.totalorder %s100, %s101
      %p113 = scmp.eq.s32.totalorder %s28, 1
      %p114 = por %p112, %p113
      %p116 = scmp.ne.s32.totalorder %s101, %s115
      %p117 = scmp.eq.s32.totalorder %s28, 0
      %p118 = por %p116, %p117
      %s119 = ssub.s32 %s22, %s29
      %p120 = scmp.eq.s32.totalorder %s119, 0
      %s122 = sadd.s32 %s121, 1
      %s123 = scalar_select %p120, %s121, %s122
      %p126 = pneg %p120
      %p127 = scmp.eq.s32.totalorder %s22, 1
      %p128 = por %p126, %p127
      %p129 = scmp.ne.s32.totalorder %s121, %s124
      %p130 = scmp.eq.s32.totalorder %s22, 0
      %p131 = por %p129, %p130
      %p132 = scmp.ne.s32.totalorder %s121, %s124
      %p133 = scmp.eq.s32.totalorder %s27, 1
      %p134 = por %p132, %p133
      %p135 = scmp.ne.s32.totalorder %s124, %s125
      %p136 = scmp.eq.s32.totalorder %s27, 0
      %p137 = por %p135, %p136
      %p138 = scmp.ne.s32.totalorder %s124, %s125
      %p139 = scmp.eq.s32.totalorder %s28, 1
      %p140 = por %p138, %p139
      %p142 = scmp.ne.s32.totalorder %s125, %s141
      %p143 = scmp.eq.s32.totalorder %s28, 0
      %p144 = por %p142, %p143
      %s145 = ssub.s32 %s22, %s29
      %p146 = scmp.eq.s32.totalorder %s145, 0
      %s148 = sadd.s32 %s147, 1
      %s149 = scalar_select %p146, %s147, %s148
      %p152 = pneg %p146
      %p153 = scmp.eq.s32.totalorder %s22, 1
      %p154 = por %p152, %p153
      %p155 = scmp.ne.s32.totalorder %s147, %s150
      %p156 = scmp.eq.s32.totalorder %s22, 0
      %p157 = por %p155, %p156
      %p158 = scmp.ne.s32.totalorder %s147, %s150
      %p159 = scmp.eq.s32.totalorder %s27, 1
      %p160 = por %p158, %p159
      %p161 = scmp.ne.s32.totalorder %s150, %s151
      %p162 = scmp.eq.s32.totalorder %s27, 0
      %p163 = por %p161, %p162
      %p164 = scmp.ne.s32.totalorder %s150, %s151
      %p165 = scmp.eq.s32.totalorder %s28, 1
      %p166 = por %p164, %p165
      %p168 = scmp.ne.s32.totalorder %s151, %s167
      %p169 = scmp.eq.s32.totalorder %s28, 0
      %p170 = por %p168, %p169
      %p171 = scmp.le.s32.totalorder 1, %s22
      %p172 = scmp.lt.s32.totalorder %s22, 3
      %p173 = pnand %p171, %p172
      %p174 = pneg %p173
      // Predicated region
      $region9: #{tpu_custom_call.1} parent=5 // pred_check
        _
      $region10: #{tpu_custom_call.1} parent=5 // pred_check_branch
        %176 = sbr.rel (%p173) target = $region12
      $region11: #{tpu_custom_call.1} parent=5 // pred_region
        %s177 = ssub.s32 %s22, 1
        // Predicated region
        $region13: #{tpu_custom_call.1} parent=11 // pred_check
          %p178 = pneg %p69
        $region14: #{tpu_custom_call.1} parent=11 // pred_check_branch
          %180 = sbr.rel (%p178) target = $region16
        $region15: #{tpu_custom_call.1} parent=11 // pred_region
          %s182 = ssub.s32 512, 512
          %183 = vsyncadd [#allocation6], %s182
          %s184 = sshll.u32 [#allocation5], 4
          %s185 = int_to_ptr.vmem [resolvable:$true] %s184
          %190 = dma.hbm_to_vmem [thread:$0]  %s1, 512, %s185, [#allocation6], 128, 128, 8
        $region16: #{tpu_custom_call.1} parent=11 // pred_fallthru
          _
        // Predicated region
        $region17: #{tpu_custom_call.1} parent=11 // pred_check
          %p191 = pneg %p90
        $region18: #{tpu_custom_call.1} parent=11 // pred_check_branch
          %193 = sbr.rel (%p191) target = $region20
        $region19: #{tpu_custom_call.1} parent=11 // pred_region
          %s195 = ssub.s32 512, 512
          %196 = vsyncadd [#allocation6], %s195
          %s197 = sshll.u32 [#allocation7], 4
          %s198 = int_to_ptr.vmem [resolvable:$true] %s197
          %203 = dma.hbm_to_vmem [thread:$0]  %s2, 512, %s198, [#allocation6], 128, 128, 8
        $region20: #{tpu_custom_call.1} parent=11 // pred_fallthru
          _
        // Predicated region
        $region21: #{tpu_custom_call.1} parent=11 // pred_check
          %p204 = pneg %p111
        $region22: #{tpu_custom_call.1} parent=11 // pred_check_branch
          %206 = sbr.rel (%p204) target = $region24
        $region23: #{tpu_custom_call.1} parent=11 // pred_region
          _
        $region24: #{tpu_custom_call.1} parent=11 // pred_fallthru
          _
      $region12: #{tpu_custom_call.1} parent=5 // pred_fallthru
        _
      %p207 = scmp.lt.s32.totalorder %s22, 2
      // Predicated region
      $region25: #{tpu_custom_call.1} parent=5 // pred_check
        %p208 = pneg %p207
      $region26: #{tpu_custom_call.1} parent=5 // pred_check_branch
        %210 = sbr.rel (%p208) target = $region28
      $region27: #{tpu_custom_call.1} parent=5 // pred_region
        // Predicated region
        $region29: #{tpu_custom_call.1} parent=27 // pred_check
          %p211 = pneg %p42
        $region30: #{tpu_custom_call.1} parent=27 // pred_check_branch
          %213 = sbr.rel (%p211) target = $region32
        $region31: #{tpu_custom_call.1} parent=27 // pred_region
          %s214 = sand.u32 %s32, 1
          %s215 = scalar_lea.sflag [#allocation3], %s214
          %s216 = sand.u32 %s32, 1
          %s217 = smul.addr %s216, 8
          %s218 = scalar_lea.vmem [#allocation2], %s217
          %s220 = ssub.s32 128, 128
          %221 = vsyncadd %s215, %s220
          %s222 = smul.addr %s22, 128
          %s223 = scalar_lea.hbm %s0, %s222
          %s225 = sshll.u32 %s218, 4
          %s226 = int_to_ptr.vmem [resolvable:$true] %s225
          %228 = dma.hbm_to_vmem [thread:$0]  %s223, 128, %s226, %s215
        $region32: #{tpu_custom_call.1} parent=27 // pred_fallthru
          _
      $region28: #{tpu_custom_call.1} parent=5 // pred_fallthru
        _
      %p229 = scmp.le.s32.totalorder 1, %s22
      %p230 = scmp.lt.s32.totalorder %s22, 3
      %p231 = pnand %p229, %p230
      %p232 = pneg %p231
      // Predicated region
      $region33: #{tpu_custom_call.1} parent=5 // pred_check
        _
      $region34: #{tpu_custom_call.1} parent=5 // pred_check_branch
        %234 = sbr.rel (%p231) target = $region36
      $region35: #{tpu_custom_call.1} parent=5 // pred_region
        %s235 = ssub.s32 %s22, 1
        %s236 = sand.u32 %s35, 1
        %s237 = scalar_lea.sflag [#allocation3], %s236
        %s238 = sand.u32 %s35, 1
        %s239 = smul.addr %s238, 8
        %s240 = scalar_lea.vmem [#allocation2], %s239
        // Predicated region
        $region37: #{tpu_custom_call.1} parent=35 // pred_check
          %p241 = pneg %p48
        $region38: #{tpu_custom_call.1} parent=35 // pred_check_branch
          %243 = sbr.rel (%p241) target = $region40
        $region39: #{tpu_custom_call.1} parent=35 // pred_region
          %244 = dma.done %s237, 128
        $region40: #{tpu_custom_call.1} parent=35 // pred_fallthru
          _
        // Predicated region
        $region41: #{tpu_custom_call.1} parent=35 // pred_check
          %p245 = pneg %p69
        $region42: #{tpu_custom_call.1} parent=35 // pred_check_branch
          %247 = sbr.rel (%p245) target = $region44
        $region43: #{tpu_custom_call.1} parent=35 // pred_region
          %248 = dma.done [#allocation6], 512
        $region44: #{tpu_custom_call.1} parent=35 // pred_fallthru
          _
        // Predicated region
        $region45: #{tpu_custom_call.1} parent=35 // pred_check
          %p249 = pneg %p90
        $region46: #{tpu_custom_call.1} parent=35 // pred_check_branch
          %251 = sbr.rel (%p249) target = $region48
        $region47: #{tpu_custom_call.1} parent=35 // pred_region
          %252 = dma.done [#allocation6], 512
        $region48: #{tpu_custom_call.1} parent=35 // pred_fallthru
          _
        %s253 = sand.u32 %s35, 1
        %s254 = scalar_lea.sflag [#allocation3], %s253
        %s255 = sand.u32 %s35, 1
        %s256 = smul.addr %s255, 8
        %s257 = scalar_lea.vmem [#allocation2], %s256
        %p258 = pneg %p48
        %p259 = pneg %p45
        %p260 = pneg %p69
        %p261 = pneg %p66
        %p262 = pneg %p90
        %p263 = pneg %p87
        %p264 = pneg %p111
        %p265 = pneg %p108
        %p266 = pneg %p137
        %p267 = pneg %p134
        %s268 = sand.u32 %s124, 1
        %s269 = scalar_lea.sflag [#allocation4], %s268
        %s270 = sand.u32 %s124, 1
        %s271 = smul.addr %s270, 8
        %s272 = scalar_lea.vmem [#allocation8], %s271
        %p273 = pneg %p163
        %p274 = pneg %p160
        %s275 = sand.u32 %s150, 1
        %s276 = scalar_lea.sflag [#allocation10], %s275
        %s277 = sand.u32 %s150, 1
        %s278 = smul.addr %s277, 64
        %s279 = scalar_lea.vmem [#allocation9], %s278
        %v280 = vld [vmem:[%s240] sm:$0xff]
        %v281 = vld [vmem:[#allocation5] sm:$0xff]
        %v282 = vld [vmem:[#allocation5 + $0x8] sm:$0xff]
        %v283 = vld [vmem:[#allocation5 + $0x10] sm:$0xff]
        %v284 = vld [vmem:[#allocation5 + $0x18] sm:$0xff]
        %vm285 = vcmask 261120
        %v287 = vsel %vm285, %v280, 0
        %289 = vmatprep.subr.mxu0 0.0
        %290 = vmatpush1.msra.mxu0 %v281
        %291 = vmatprep.subr.mxu0 0.0
        %292 = vmatpush1.msra.mxu0 %v282
        %293 = vmatprep.subr.mxu0 0.0
        %294 = vmatpush1.msra.mxu0 %v283
        %295 = vmatprep.subr.mxu0 0.0
        %296 = vmatpush1.msra.mxu0 %v284
        %297 = vmatprep.subr.mxu0 0.0
        %298 = vmatpush1.msra.mxu0 0.0
        %299 = vmatprep.subr.mxu0 0.0
        %300 = vmatpush1.msra.mxu0 0.0
        %301 = vmatprep.subr.mxu0 0.0
        %302 = vmatpush1.msra.mxu0 0.0
        %303 = vmatprep.subr.mxu0 0.0
        %304 = vmatpush1.msra.mxu0 0.0
        %305 = vmatprep.subr.mxu0 0.0
        %306 = vmatpush1.msra.mxu0 0.0
        %307 = vmatprep.subr.mxu0 0.0
        %308 = vmatpush1.msra.mxu0 0.0
        %309 = vmatprep.subr.mxu0 0.0
        %310 = vmatpush1.msra.mxu0 0.0
        %311 = vmatprep.subr.mxu0 0.0
        %312 = vmatpush1.msra.mxu0 0.0
        %313 = vmatprep.subr.mxu0 0.0
        %314 = vmatpush1.msra.mxu0 0.0
        %315 = vmatprep.subr.mxu0 0.0
        %316 = vmatpush1.msra.mxu0 0.0
        %317 = vmatprep.subr.mxu0 0.0
        %318 = vmatpush1.msra.mxu0 0.0
        %319 = vmatprep.subr.mxu0 0.0
        %320 = vmatpush1.msra.mxu0 0.0
        %321 = vmatprep.subr.mxu0 0.0
        %322 = vmatpush1.msra.mxu0 0.0
        %323 = vmatprep.subr.mxu0 0.0
        %324 = vmatpush1.msra.mxu0 0.0
        %325 = vmatprep.subr.mxu0 0.0
        %326 = vmatpush1.msra.mxu0 0.0
        %327 = vmatprep.subr.mxu0 0.0
        %328 = vmatpush1.msra.mxu0 0.0
        %329 = vmatprep.subr.mxu0 0.0
        %330 = vmatpush1.msra.mxu0 0.0
        %331 = vmatprep.subr.mxu0 0.0
        %332 = vmatpush1.msra.mxu0 0.0
        %333 = vmatprep.subr.mxu0 0.0
        %334 = vmatpush1.msra.mxu0 0.0
        %335 = vmatprep.subr.mxu0 0.0
        %336 = vmatpush1.msra.mxu0 0.0
        %337 = vmatprep.subr.mxu0 0.0
        %338 = vmatpush1.msra.mxu0 0.0
        %339 = vmatprep.subr.mxu0 0.0
        %340 = vmatpush1.msra.mxu0 0.0
        %341 = vmatprep.subr.mxu0 0.0
        %342 = vmatpush1.msra.mxu0 0.0
        %343 = vmatprep.subr.mxu0 0.0
        %344 = vmatpush1.msra.mxu0 0.0
        %345 = vmatprep.subr.mxu0 0.0
        %346 = vmatpush1.msra.mxu0 0.0
        %347 = vmatprep.subr.mxu0 0.0
        %348 = vmatpush1.msra.mxu0 0.0
        %349 = vmatprep.subr.mxu0 0.0
        %350 = vmatpush1.msra.mxu0 0.0
        %351 = vmatprep.subr.mxu0 0.0
        %352 = vmatpush1.msra.mxu0 0.0
        %353 = vmatprep.mubr.f32.mxu0 0.0
        %354 = vmatmul.mubr.f32.gmra.mrb[0].mxu0 %v287
        %v355 = vpop.f32.mrb[0].mxu0
        %v356 = vadd.f32 0.0, %v355
        %v357 = vpop.f32.mrb[0].mxu0
        %358 = vdwg.mxu0
        %360 = vrot.lane.b32.xlu0 %v356, 96
        %v361 = vpop.permute.xlu0 %360
        %vm362 = vcmask 31744
        %v363 = vsel %vm362, %v356, 0
        %v365 = vsel %vm362, %v361, 0
        %367 = vmatprep.subr.mxu0 0.0
        %368 = vmatpush1.xpose.msra.mxu0 %v365
        %369 = vmatprep.subr.mxu0 0.0
        %370 = vmatpush1.xpose.msra.mxu0 0.0
        %371 = vmatprep.subr.mxu0 0.0
        %372 = vmatpush1.xpose.msra.mxu0 0.0
        %373 = vmatprep.subr.mxu0 0.0
        %374 = vmatpush1.xpose.msra.mxu0 0.0
        %375 = vmatprep.subr.mxu0 0.0
        %376 = vmatpush1.xpose.msra.mxu0 0.0
        %377 = vmatprep.subr.mxu0 0.0
        %378 = vmatpush1.xpose.msra.mxu0 0.0
        %379 = vmatprep.subr.mxu0 0.0
        %380 = vmatpush1.xpose.msra.mxu0 0.0
        %381 = vmatprep.subr.mxu0 0.0
        %382 = vmatpush1.xpose.msra.mxu0 0.0
        %383 = vmatprep.subr.mxu0 0.0
        %384 = vmatpush1.xpose.msra.mxu0 0.0
        %385 = vmatprep.subr.mxu0 0.0
        %386 = vmatpush1.xpose.msra.mxu0 0.0
        %387 = vmatprep.subr.mxu0 0.0
        %388 = vmatpush1.xpose.msra.mxu0 0.0
        %389 = vmatprep.subr.mxu0 0.0
        %390 = vmatpush1.xpose.msra.mxu0 0.0
        %391 = vmatprep.subr.mxu0 0.0
        %392 = vmatpush1.xpose.msra.mxu0 0.0
        %393 = vmatprep.subr.mxu0 0.0
        %394 = vmatpush1.xpose.msra.mxu0 0.0
        %395 = vmatprep.subr.mxu0 0.0
        %396 = vmatpush1.xpose.msra.mxu0 0.0
        %397 = vmatprep.subr.mxu0 0.0
        %398 = vmatpush1.xpose.msra.mxu0 0.0
        %399 = vmatprep.subr.mxu0 0.0
        %400 = vmatpush1.xpose.msra.mxu0 0.0
        %401 = vmatprep.subr.mxu0 0.0
        %402 = vmatpush1.xpose.msra.mxu0 0.0
        %403 = vmatprep.subr.mxu0 0.0
        %404 = vmatpush1.xpose.msra.mxu0 0.0
        %405 = vmatprep.subr.mxu0 0.0
        %406 = vmatpush1.xpose.msra.mxu0 0.0
        %407 = vmatprep.subr.mxu0 0.0
        %408 = vmatpush1.xpose.msra.mxu0 0.0
        %409 = vmatprep.subr.mxu0 0.0
        %410 = vmatpush1.xpose.msra.mxu0 0.0
        %411 = vmatprep.subr.mxu0 0.0
        %412 = vmatpush1.xpose.msra.mxu0 0.0
        %413 = vmatprep.subr.mxu0 0.0
        %414 = vmatpush1.xpose.msra.mxu0 0.0
        %415 = vmatprep.subr.mxu0 0.0
        %416 = vmatpush1.xpose.msra.mxu0 0.0
        %417 = vmatprep.subr.mxu0 0.0
        %418 = vmatpush1.xpose.msra.mxu0 0.0
        %419 = vmatprep.subr.mxu0 0.0
        %420 = vmatpush1.xpose.msra.mxu0 0.0
        %421 = vmatprep.subr.mxu0 0.0
        %422 = vmatpush1.xpose.msra.mxu0 0.0
        %423 = vmatprep.subr.mxu0 0.0
        %424 = vmatpush1.xpose.msra.mxu0 0.0
        %425 = vmatprep.subr.mxu0 0.0
        %426 = vmatpush1.xpose.msra.mxu0 0.0
        %427 = vmatprep.subr.mxu0 0.0
        %428 = vmatpush1.xpose.msra.mxu0 0.0
        %429 = vmatprep.subr.mxu0 0.0
        %430 = vmatpush1.xpose.msra.mxu0 0.0
        %431 = vmatprep.mubr.f32.mxu0 0.0
        %432 = vmatmul.mubr.f32.gmra.mrb[0].mxu0 %v363
        %v433 = vpop.f32.mrb[0].mxu0
        %v434 = vadd.f32 0.0, %v433
        %v435 = vpop.f32.mrb[0].mxu0
        %436 = vdwg.mxu0
        %v437 = vmul.f32 %v434, 0.5
        %vm438 = vcmask 64512
        %v439 = vsel %vm438, %v437, -inf
        %440 = vmax.xlane.f32.xlu0 %v439
        %v441 = vpop.xlane.xlu0 %440
        %v442 = vsub.f32 %v437, %v441
        %v443 = vmul.f32 %v442, 1.442695
        %v444 = vpow.pop %v443
        %v445 = vsel %vm438, %v444, 0.0
        %446 = vadd.xlane.f32.xlu0 %v445
        %v447 = vpop.xlane.xlu0 %446
        %v448 = vrcp.pop %v447
        %v449 = vmul.f32 %v444, %v448
        %450 = vst.msk [vmem:[%s279] sm:$0xff] %vm438, %v449
        %451 = vrot.lane.b32.xlu0 %v356, 64
        %v452 = vpop.permute.xlu0 %451
        %v455 = vsel %vm438, %v449, 0
        %457 = vmatprep.subr.mxu0 0.0
        %458 = vmatpush1.msra.mxu0 %v452
        %459 = vmatprep.subr.mxu0 0.0
        %460 = vmatpush1.msra.mxu0 0.0
        %461 = vmatprep.subr.mxu0 0.0
        %462 = vmatpush1.msra.mxu0 0.0
        %463 = vmatprep.subr.mxu0 0.0
        %464 = vmatpush1.msra.mxu0 0.0
        %465 = vmatprep.subr.mxu0 0.0
        %466 = vmatpush1.msra.mxu0 0.0
        %467 = vmatprep.subr.mxu0 0.0
        %468 = vmatpush1.msra.mxu0 0.0
        %469 = vmatprep.subr.mxu0 0.0
        %470 = vmatpush1.msra.mxu0 0.0
        %471 = vmatprep.subr.mxu0 0.0
        %472 = vmatpush1.msra.mxu0 0.0
        %473 = vmatprep.subr.mxu0 0.0
        %474 = vmatpush1.msra.mxu0 0.0
        %475 = vmatprep.subr.mxu0 0.0
        %476 = vmatpush1.msra.mxu0 0.0
        %477 = vmatprep.subr.mxu0 0.0
        %478 = vmatpush1.msra.mxu0 0.0
        %479 = vmatprep.subr.mxu0 0.0
        %480 = vmatpush1.msra.mxu0 0.0
        %481 = vmatprep.subr.mxu0 0.0
        %482 = vmatpush1.msra.mxu0 0.0
        %483 = vmatprep.subr.mxu0 0.0
        %484 = vmatpush1.msra.mxu0 0.0
        %485 = vmatprep.subr.mxu0 0.0
        %486 = vmatpush1.msra.mxu0 0.0
        %487 = vmatprep.subr.mxu0 0.0
        %488 = vmatpush1.msra.mxu0 0.0
        %489 = vmatprep.subr.mxu0 0.0
        %490 = vmatpush1.msra.mxu0 0.0
        %491 = vmatprep.subr.mxu0 0.0
        %492 = vmatpush1.msra.mxu0 0.0
        %493 = vmatprep.subr.mxu0 0.0
        %494 = vmatpush1.msra.mxu0 0.0
        %495 = vmatprep.subr.mxu0 0.0
        %496 = vmatpush1.msra.mxu0 0.0
        %497 = vmatprep.subr.mxu0 0.0
        %498 = vmatpush1.msra.mxu0 0.0
        %499 = vmatprep.subr.mxu0 0.0
        %500 = vmatpush1.msra.mxu0 0.0
        %501 = vmatprep.subr.mxu0 0.0
        %502 = vmatpush1.msra.mxu0 0.0
        %503 = vmatprep.subr.mxu0 0.0
        %504 = vmatpush1.msra.mxu0 0.0
        %505 = vmatprep.subr.mxu0 0.0
        %506 = vmatpush1.msra.mxu0 0.0
        %507 = vmatprep.subr.mxu0 0.0
        %508 = vmatpush1.msra.mxu0 0.0
        %509 = vmatprep.subr.mxu0 0.0
        %510 = vmatpush1.msra.mxu0 0.0
        %511 = vmatprep.subr.mxu0 0.0
        %512 = vmatpush1.msra.mxu0 0.0
        %513 = vmatprep.subr.mxu0 0.0
        %514 = vmatpush1.msra.mxu0 0.0
        %515 = vmatprep.subr.mxu0 0.0
        %516 = vmatpush1.msra.mxu0 0.0
        %517 = vmatprep.subr.mxu0 0.0
        %518 = vmatpush1.msra.mxu0 0.0
        %519 = vmatprep.subr.mxu0 0.0
        %520 = vmatpush1.msra.mxu0 0.0
        %521 = vmatprep.mubr.f32.mxu0 0.0
        %522 = vmatmul.mubr.f32.gmra.mrb[0].mxu0 %v455
        %v523 = vpop.f32.mrb[0].mxu0
        %v524 = vadd.f32 0.0, %v523
        %v525 = vpop.f32.mrb[0].mxu0
        %526 = vdwg.mxu0
        %527 = vrot.lane.b32.xlu0 %v356, 124
        %v528 = vpop.permute.xlu0 %527
        %529 = vrot.lane.b32.xlu0 %v356, 92
        %v530 = vpop.permute.xlu0 %529
        %v531 = vsel %vm362, %v528, 0
        %v533 = vsel %vm362, %v530, 0
        %535 = vmatprep.subr.mxu0 0.0
        %536 = vmatpush1.xpose.msra.mxu0 %v533
        %537 = vmatprep.subr.mxu0 0.0
        %538 = vmatpush1.xpose.msra.mxu0 0.0
        %539 = vmatprep.subr.mxu0 0.0
        %540 = vmatpush1.xpose.msra.mxu0 0.0
        %541 = vmatprep.subr.mxu0 0.0
        %542 = vmatpush1.xpose.msra.mxu0 0.0
        %543 = vmatprep.subr.mxu0 0.0
        %544 = vmatpush1.xpose.msra.mxu0 0.0
        %545 = vmatprep.subr.mxu0 0.0
        %546 = vmatpush1.xpose.msra.mxu0 0.0
        %547 = vmatprep.subr.mxu0 0.0
        %548 = vmatpush1.xpose.msra.mxu0 0.0
        %549 = vmatprep.subr.mxu0 0.0
        %550 = vmatpush1.xpose.msra.mxu0 0.0
        %551 = vmatprep.subr.mxu0 0.0
        %552 = vmatpush1.xpose.msra.mxu0 0.0
        %553 = vmatprep.subr.mxu0 0.0
        %554 = vmatpush1.xpose.msra.mxu0 0.0
        %555 = vmatprep.subr.mxu0 0.0
        %556 = vmatpush1.xpose.msra.mxu0 0.0
        %557 = vmatprep.subr.mxu0 0.0
        %558 = vmatpush1.xpose.msra.mxu0 0.0
        %559 = vmatprep.subr.mxu0 0.0
        %560 = vmatpush1.xpose.msra.mxu0 0.0
        %561 = vmatprep.subr.mxu0 0.0
        %562 = vmatpush1.xpose.msra.mxu0 0.0
        %563 = vmatprep.subr.mxu0 0.0
        %564 = vmatpush1.xpose.msra.mxu0 0.0
        %565 = vmatprep.subr.mxu0 0.0
        %566 = vmatpush1.xpose.msra.mxu0 0.0
        %567 = vmatprep.subr.mxu0 0.0
        %568 = vmatpush1.xpose.msra.mxu0 0.0
        %569 = vmatprep.subr.mxu0 0.0
        %570 = vmatpush1.xpose.msra.mxu0 0.0
        %571 = vmatprep.subr.mxu0 0.0
        %572 = vmatpush1.xpose.msra.mxu0 0.0
        %573 = vmatprep.subr.mxu0 0.0
        %574 = vmatpush1.xpose.msra.mxu0 0.0
        %575 = vmatprep.subr.mxu0 0.0
        %576 = vmatpush1.xpose.msra.mxu0 0.0
        %577 = vmatprep.subr.mxu0 0.0
        %578 = vmatpush1.xpose.msra.mxu0 0.0
        %579 = vmatprep.subr.mxu0 0.0
        %580 = vmatpush1.xpose.msra.mxu0 0.0
        %581 = vmatprep.subr.mxu0 0.0
        %582 = vmatpush1.xpose.msra.mxu0 0.0
        %583 = vmatprep.subr.mxu0 0.0
        %584 = vmatpush1.xpose.msra.mxu0 0.0
        %585 = vmatprep.subr.mxu0 0.0
        %586 = vmatpush1.xpose.msra.mxu0 0.0
        %587 = vmatprep.subr.mxu0 0.0
        %588 = vmatpush1.xpose.msra.mxu0 0.0
        %589 = vmatprep.subr.mxu0 0.0
        %590 = vmatpush1.xpose.msra.mxu0 0.0
        %591 = vmatprep.subr.mxu0 0.0
        %592 = vmatpush1.xpose.msra.mxu0 0.0
        %593 = vmatprep.subr.mxu0 0.0
        %594 = vmatpush1.xpose.msra.mxu0 0.0
        %595 = vmatprep.subr.mxu0 0.0
        %596 = vmatpush1.xpose.msra.mxu0 0.0
        %597 = vmatprep.subr.mxu0 0.0
        %598 = vmatpush1.xpose.msra.mxu0 0.0
        %599 = vmatprep.mubr.f32.mxu0 0.0
        %600 = vmatmul.mubr.f32.gmra.mrb[0].mxu0 %v531
        %v601 = vpop.f32.mrb[0].mxu0
        %v602 = vadd.f32 0.0, %v601
        %v603 = vpop.f32.mrb[0].mxu0
        %604 = vdwg.mxu0
        %v605 = vmul.f32 %v602, 0.5
        %v606 = vsel %vm438, %v605, -inf
        %607 = vmax.xlane.f32.xlu0 %v606
        %v608 = vpop.xlane.xlu0 %607
        %v609 = vsub.f32 %v605, %v608
        %v610 = vmul.f32 %v609, 1.442695
        %v611 = vpow.pop %v610
        %v612 = vsel %vm438, %v611, 0.0
        %613 = vadd.xlane.f32.xlu0 %v612
        %v614 = vpop.xlane.xlu0 %613
        %v615 = vrcp.pop %v614
        %v616 = vmul.f32 %v611, %v615
        %s617 = scalar_lea.vmem %s279, 8 [#allocation9]
        %618 = vst.msk [vmem:[%s617] sm:$0xff] %vm438, %v616
        %619 = vrot.lane.b32.xlu0 %v356, 60
        %v620 = vpop.permute.xlu0 %619
        %v623 = vsel %vm438, %v616, 0
        %625 = vmatprep.subr.mxu0 0.0
        %626 = vmatpush1.msra.mxu0 %v620
        %627 = vmatprep.subr.mxu0 0.0
        %628 = vmatpush1.msra.mxu0 0.0
        %629 = vmatprep.subr.mxu0 0.0
        %630 = vmatpush1.msra.mxu0 0.0
        %631 = vmatprep.subr.mxu0 0.0
        %632 = vmatpush1.msra.mxu0 0.0
        %633 = vmatprep.subr.mxu0 0.0
        %634 = vmatpush1.msra.mxu0 0.0
        %635 = vmatprep.subr.mxu0 0.0
        %636 = vmatpush1.msra.mxu0 0.0
        %637 = vmatprep.subr.mxu0 0.0
        %638 = vmatpush1.msra.mxu0 0.0
        %639 = vmatprep.subr.mxu0 0.0
        %640 = vmatpush1.msra.mxu0 0.0
        %641 = vmatprep.subr.mxu0 0.0
        %642 = vmatpush1.msra.mxu0 0.0
        %643 = vmatprep.subr.mxu0 0.0
        %644 = vmatpush1.msra.mxu0 0.0
        %645 = vmatprep.subr.mxu0 0.0
        %646 = vmatpush1.msra.mxu0 0.0
        %647 = vmatprep.subr.mxu0 0.0
        %648 = vmatpush1.msra.mxu0 0.0
        %649 = vmatprep.subr.mxu0 0.0
        %650 = vmatpush1.msra.mxu0 0.0
        %651 = vmatprep.subr.mxu0 0.0
        %652 = vmatpush1.msra.mxu0 0.0
        %653 = vmatprep.subr.mxu0 0.0
        %654 = vmatpush1.msra.mxu0 0.0
        %655 = vmatprep.subr.mxu0 0.0
        %656 = vmatpush1.msra.mxu0 0.0
        %657 = vmatprep.subr.mxu0 0.0
        %658 = vmatpush1.msra.mxu0 0.0
        %659 = vmatprep.subr.mxu0 0.0
        %660 = vmatpush1.msra.mxu0 0.0
        %661 = vmatprep.subr.mxu0 0.0
        %662 = vmatpush1.msra.mxu0 0.0
        %663 = vmatprep.subr.mxu0 0.0
        %664 = vmatpush1.msra.mxu0 0.0
        %665 = vmatprep.subr.mxu0 0.0
        %666 = vmatpush1.msra.mxu0 0.0
        %667 = vmatprep.subr.mxu0 0.0
        %668 = vmatpush1.msra.mxu0 0.0
        %669 = vmatprep.subr.mxu0 0.0
        %670 = vmatpush1.msra.mxu0 0.0
        %671 = vmatprep.subr.mxu0 0.0
        %672 = vmatpush1.msra.mxu0 0.0
        %673 = vmatprep.subr.mxu0 0.0
        %674 = vmatpush1.msra.mxu0 0.0
        %675 = vmatprep.subr.mxu0 0.0
        %676 = vmatpush1.msra.mxu0 0.0
        %677 = vmatprep.subr.mxu0 0.0
        %678 = vmatpush1.msra.mxu0 0.0
        %679 = vmatprep.subr.mxu0 0.0
        %680 = vmatpush1.msra.mxu0 0.0
        %681 = vmatprep.subr.mxu0 0.0
        %682 = vmatpush1.msra.mxu0 0.0
        %683 = vmatprep.subr.mxu0 0.0
        %684 = vmatpush1.msra.mxu0 0.0
        %685 = vmatprep.subr.mxu0 0.0
        %686 = vmatpush1.msra.mxu0 0.0
        %687 = vmatprep.subr.mxu0 0.0
        %688 = vmatpush1.msra.mxu0 0.0
        %689 = vmatprep.mubr.f32.mxu0 0.0
        %690 = vmatmul.mubr.f32.gmra.mrb[0].mxu0 %v623
        %v691 = vpop.f32.mrb[0].mxu0
        %v692 = vadd.f32 0.0, %v691
        %v693 = vpop.f32.mrb[0].mxu0
        %694 = vdwg.mxu0
        %695 = vrot.lane.b32.xlu0 %v356, 120
        %v696 = vpop.permute.xlu0 %695
        %697 = vrot.lane.b32.xlu0 %v356, 88
        %v698 = vpop.permute.xlu0 %697
        %v699 = vsel %vm362, %v696, 0
        %v701 = vsel %vm362, %v698, 0
        %703 = vmatprep.subr.mxu0 0.0
        %704 = vmatpush1.xpose.msra.mxu0 %v701
        %705 = vmatprep.subr.mxu0 0.0
        %706 = vmatpush1.xpose.msra.mxu0 0.0
        %707 = vmatprep.subr.mxu0 0.0
        %708 = vmatpush1.xpose.msra.mxu0 0.0
        %709 = vmatprep.subr.mxu0 0.0
        %710 = vmatpush1.xpose.msra.mxu0 0.0
        %711 = vmatprep.subr.mxu0 0.0
        %712 = vmatpush1.xpose.msra.mxu0 0.0
        %713 = vmatprep.subr.mxu0 0.0
        %714 = vmatpush1.xpose.msra.mxu0 0.0
        %715 = vmatprep.subr.mxu0 0.0
        %716 = vmatpush1.xpose.msra.mxu0 0.0
        %717 = vmatprep.subr.mxu0 0.0
        %718 = vmatpush1.xpose.msra.mxu0 0.0
        %719 = vmatprep.subr.mxu0 0.0
        %720 = vmatpush1.xpose.msra.mxu0 0.0
        %721 = vmatprep.subr.mxu0 0.0
        %722 = vmatpush1.xpose.msra.mxu0 0.0
        %723 = vmatprep.subr.mxu0 0.0
        %724 = vmatpush1.xpose.msra.mxu0 0.0
        %725 = vmatprep.subr.mxu0 0.0
        %726 = vmatpush1.xpose.msra.mxu0 0.0
        %727 = vmatprep.subr.mxu0 0.0
        %728 = vmatpush1.xpose.msra.mxu0 0.0
        %729 = vmatprep.subr.mxu0 0.0
        %730 = vmatpush1.xpose.msra.mxu0 0.0
        %731 = vmatprep.subr.mxu0 0.0
        %732 = vmatpush1.xpose.msra.mxu0 0.0
        %733 = vmatprep.subr.mxu0 0.0
        %734 = vmatpush1.xpose.msra.mxu0 0.0
        %735 = vmatprep.subr.mxu0 0.0
        %736 = vmatpush1.xpose.msra.mxu0 0.0
        %737 = vmatprep.subr.mxu0 0.0
        %738 = vmatpush1.xpose.msra.mxu0 0.0
        %739 = vmatprep.subr.mxu0 0.0
        %740 = vmatpush1.xpose.msra.mxu0 0.0
        %741 = vmatprep.subr.mxu0 0.0
        %742 = vmatpush1.xpose.msra.mxu0 0.0
        %743 = vmatprep.subr.mxu0 0.0
        %744 = vmatpush1.xpose.msra.mxu0 0.0
        %745 = vmatprep.subr.mxu0 0.0
        %746 = vmatpush1.xpose.msra.mxu0 0.0
        %747 = vmatprep.subr.mxu0 0.0
        %748 = vmatpush1.xpose.msra.mxu0 0.0
        %749 = vmatprep.subr.mxu0 0.0
        %750 = vmatpush1.xpose.msra.mxu0 0.0
        %751 = vmatprep.subr.mxu0 0.0
        %752 = vmatpush1.xpose.msra.mxu0 0.0
        %753 = vmatprep.subr.mxu0 0.0
        %754 = vmatpush1.xpose.msra.mxu0 0.0
        %755 = vmatprep.subr.mxu0 0.0
        %756 = vmatpush1.xpose.msra.mxu0 0.0
        %757 = vmatprep.subr.mxu0 0.0
        %758 = vmatpush1.xpose.msra.mxu0 0.0
        %759 = vmatprep.subr.mxu0 0.0
        %760 = vmatpush1.xpose.msra.mxu0 0.0
        %761 = vmatprep.subr.mxu0 0.0
        %762 = vmatpush1.xpose.msra.mxu0 0.0
        %763 = vmatprep.subr.mxu0 0.0
        %764 = vmatpush1.xpose.msra.mxu0 0.0
        %765 = vmatprep.subr.mxu0 0.0
        %766 = vmatpush1.xpose.msra.mxu0 0.0
        %767 = vmatprep.mubr.f32.mxu0 0.0
        %768 = vmatmul.mubr.f32.gmra.mrb[0].mxu0 %v699
        %v769 = vpop.f32.mrb[0].mxu0
        %v770 = vadd.f32 0.0, %v769
        %v771 = vpop.f32.mrb[0].mxu0
        %772 = vdwg.mxu0
        %v773 = vmul.f32 %v770, 0.5
        %v774 = vsel %vm438, %v773, -inf
        %775 = vmax.xlane.f32.xlu0 %v774
        %v776 = vpop.xlane.xlu0 %775
        %v777 = vsub.f32 %v773, %v776
        %v778 = vmul.f32 %v777, 1.442695
        %v779 = vpow.pop %v778
        %v780 = vsel %vm438, %v779, 0.0
        %781 = vadd.xlane.f32.xlu0 %v780
        %v782 = vpop.xlane.xlu0 %781
        %v783 = vrcp.pop %v782
        %v784 = vmul.f32 %v779, %v783
        %s785 = scalar_lea.vmem %s279, 16 [#allocation9]
        %786 = vst.msk [vmem:[%s785] sm:$0xff] %vm438, %v784
        %787 = vrot.lane.b32.xlu0 %v356, 56
        %v788 = vpop.permute.xlu0 %787
        %v791 = vsel %vm438, %v784, 0
        %793 = vmatprep.subr.mxu0 0.0
        %794 = vmatpush1.msra.mxu0 %v788
        %795 = vmatprep.subr.mxu0 0.0
        %796 = vmatpush1.msra.mxu0 0.0
        %797 = vmatprep.subr.mxu0 0.0
        %798 = vmatpush1.msra.mxu0 0.0
        %799 = vmatprep.subr.mxu0 0.0
        %800 = vmatpush1.msra.mxu0 0.0
        %801 = vmatprep.subr.mxu0 0.0
        %802 = vmatpush1.msra.mxu0 0.0
        %803 = vmatprep.subr.mxu0 0.0
        %804 = vmatpush1.msra.mxu0 0.0
        %805 = vmatprep.subr.mxu0 0.0
        %806 = vmatpush1.msra.mxu0 0.0
        %807 = vmatprep.subr.mxu0 0.0
        %808 = vmatpush1.msra.mxu0 0.0
        %809 = vmatprep.subr.mxu0 0.0
        %810 = vmatpush1.msra.mxu0 0.0
        %811 = vmatprep.subr.mxu0 0.0
        %812 = vmatpush1.msra.mxu0 0.0
        %813 = vmatprep.subr.mxu0 0.0
        %814 = vmatpush1.msra.mxu0 0.0
        %815 = vmatprep.subr.mxu0 0.0
        %816 = vmatpush1.msra.mxu0 0.0
        %817 = vmatprep.subr.mxu0 0.0
        %818 = vmatpush1.msra.mxu0 0.0
        %819 = vmatprep.subr.mxu0 0.0
        %820 = vmatpush1.msra.mxu0 0.0
        %821 = vmatprep.subr.mxu0 0.0
        %822 = vmatpush1.msra.mxu0 0.0
        %823 = vmatprep.subr.mxu0 0.0
        %824 = vmatpush1.msra.mxu0 0.0
        %825 = vmatprep.subr.mxu0 0.0
        %826 = vmatpush1.msra.mxu0 0.0
        %827 = vmatprep.subr.mxu0 0.0
        %828 = vmatpush1.msra.mxu0 0.0
        %829 = vmatprep.subr.mxu0 0.0
        %830 = vmatpush1.msra.mxu0 0.0
        %831 = vmatprep.subr.mxu0 0.0
        %832 = vmatpush1.msra.mxu0 0.0
        %833 = vmatprep.subr.mxu0 0.0
        %834 = vmatpush1.msra.mxu0 0.0
        %835 = vmatprep.subr.mxu0 0.0
        %836 = vmatpush1.msra.mxu0 0.0
        %837 = vmatprep.subr.mxu0 0.0
        %838 = vmatpush1.msra.mxu0 0.0
        %839 = vmatprep.subr.mxu0 0.0
        %840 = vmatpush1.msra.mxu0 0.0
        %841 = vmatprep.subr.mxu0 0.0
        %842 = vmatpush1.msra.mxu0 0.0
        %843 = vmatprep.subr.mxu0 0.0
        %844 = vmatpush1.msra.mxu0 0.0
        %845 = vmatprep.subr.mxu0 0.0
        %846 = vmatpush1.msra.mxu0 0.0
        %847 = vmatprep.subr.mxu0 0.0
        %848 = vmatpush1.msra.mxu0 0.0
        %849 = vmatprep.subr.mxu0 0.0
        %850 = vmatpush1.msra.mxu0 0.0
        %851 = vmatprep.subr.mxu0 0.0
        %852 = vmatpush1.msra.mxu0 0.0
        %853 = vmatprep.subr.mxu0 0.0
        %854 = vmatpush1.msra.mxu0 0.0
        %855 = vmatprep.subr.mxu0 0.0
        %856 = vmatpush1.msra.mxu0 0.0
        %857 = vmatprep.mubr.f32.mxu0 0.0
        %858 = vmatmul.mubr.f32.gmra.mrb[0].mxu0 %v791
        %v859 = vpop.f32.mrb[0].mxu0
        %v860 = vadd.f32 0.0, %v859
        %v861 = vpop.f32.mrb[0].mxu0
        %862 = vdwg.mxu0
        %863 = vrot.lane.b32.xlu0 %v356, 116
        %v864 = vpop.permute.xlu0 %863
        %865 = vrot.lane.b32.xlu0 %v356, 84
        %v866 = vpop.permute.xlu0 %865
        %v867 = vsel %vm362, %v864, 0
        %v869 = vsel %vm362, %v866, 0
        %871 = vmatprep.subr.mxu0 0.0
        %872 = vmatpush1.xpose.msra.mxu0 %v869
        %873 = vmatprep.subr.mxu0 0.0
        %874 = vmatpush1.xpose.msra.mxu0 0.0
        %875 = vmatprep.subr.mxu0 0.0
        %876 = vmatpush1.xpose.msra.mxu0 0.0
        %877 = vmatprep.subr.mxu0 0.0
        %878 = vmatpush1.xpose.msra.mxu0 0.0
        %879 = vmatprep.subr.mxu0 0.0
        %880 = vmatpush1.xpose.msra.mxu0 0.0
        %881 = vmatprep.subr.mxu0 0.0
        %882 = vmatpush1.xpose.msra.mxu0 0.0
        %883 = vmatprep.subr.mxu0 0.0
        %884 = vmatpush1.xpose.msra.mxu0 0.0
        %885 = vmatprep.subr.mxu0 0.0
        %886 = vmatpush1.xpose.msra.mxu0 0.0
        %887 = vmatprep.subr.mxu0 0.0
        %888 = vmatpush1.xpose.msra.mxu0 0.0
        %889 = vmatprep.subr.mxu0 0.0
        %890 = vmatpush1.xpose.msra.mxu0 0.0
        %891 = vmatprep.subr.mxu0 0.0
        %892 = vmatpush1.xpose.msra.mxu0 0.0
        %893 = vmatprep.subr.mxu0 0.0
        %894 = vmatpush1.xpose.msra.mxu0 0.0
        %895 = vmatprep.subr.mxu0 0.0
        %896 = vmatpush1.xpose.msra.mxu0 0.0
        %897 = vmatprep.subr.mxu0 0.0
        %898 = vmatpush1.xpose.msra.mxu0 0.0
        %899 = vmatprep.subr.mxu0 0.0
        %900 = vmatpush1.xpose.msra.mxu0 0.0
        %901 = vmatprep.subr.mxu0 0.0
        %902 = vmatpush1.xpose.msra.mxu0 0.0
        %903 = vmatprep.subr.mxu0 0.0
        %904 = vmatpush1.xpose.msra.mxu0 0.0
        %905 = vmatprep.subr.mxu0 0.0
        %906 = vmatpush1.xpose.msra.mxu0 0.0
        %907 = vmatprep.subr.mxu0 0.0
        %908 = vmatpush1.xpose.msra.mxu0 0.0
        %909 = vmatprep.subr.mxu0 0.0
        %910 = vmatpush1.xpose.msra.mxu0 0.0
        %911 = vmatprep.subr.mxu0 0.0
        %912 = vmatpush1.xpose.msra.mxu0 0.0
        %913 = vmatprep.subr.mxu0 0.0
        %914 = vmatpush1.xpose.msra.mxu0 0.0
        %915 = vmatprep.subr.mxu0 0.0
        %916 = vmatpush1.xpose.msra.mxu0 0.0
        %917 = vmatprep.subr.mxu0 0.0
        %918 = vmatpush1.xpose.msra.mxu0 0.0
        %919 = vmatprep.subr.mxu0 0.0
        %920 = vmatpush1.xpose.msra.mxu0 0.0
        %921 = vmatprep.subr.mxu0 0.0
        %922 = vmatpush1.xpose.msra.mxu0 0.0
        %923 = vmatprep.subr.mxu0 0.0
        %924 = vmatpush1.xpose.msra.mxu0 0.0
        %925 = vmatprep.subr.mxu0 0.0
        %926 = vmatpush1.xpose.msra.mxu0 0.0
        %927 = vmatprep.subr.mxu0 0.0
        %928 = vmatpush1.xpose.msra.mxu0 0.0
        %929 = vmatprep.subr.mxu0 0.0
        %930 = vmatpush1.xpose.msra.mxu0 0.0
        %931 = vmatprep.subr.mxu0 0.0
        %932 = vmatpush1.xpose.msra.mxu0 0.0
        %933 = vmatprep.subr.mxu0 0.0
        %934 = vmatpush1.xpose.msra.mxu0 0.0
        %935 = vmatprep.mubr.f32.mxu0 0.0
        %936 = vmatmul.mubr.f32.gmra.mrb[0].mxu0 %v867
        %v937 = vpop.f32.mrb[0].mxu0
        %v938 = vadd.f32 0.0, %v937
        %v939 = vpop.f32.mrb[0].mxu0
        %940 = vdwg.mxu0
        %v941 = vmul.f32 %v938, 0.5
        %v942 = vsel %vm438, %v941, -inf
        %943 = vmax.xlane.f32.xlu0 %v942
        %v944 = vpop.xlane.xlu0 %943
        %v945 = vsub.f32 %v941, %v944
        %v946 = vmul.f32 %v945, 1.442695
        %v947 = vpow.pop %v946
        %v948 = vsel %vm438, %v947, 0.0
        %949 = vadd.xlane.f32.xlu0 %v948
        %v950 = vpop.xlane.xlu0 %949
        %v951 = vrcp.pop %v950
        %v952 = vmul.f32 %v947, %v951
        %s953 = scalar_lea.vmem %s279, 24 [#allocation9]
        %954 = vst.msk [vmem:[%s953] sm:$0xff] %vm438, %v952
        %955 = vrot.lane.b32.xlu0 %v356, 52
        %v956 = vpop.permute.xlu0 %955
        %v959 = vsel %vm438, %v952, 0
        %961 = vmatprep.subr.mxu0 0.0
        %962 = vmatpush1.msra.mxu0 %v956
        %963 = vmatprep.subr.mxu0 0.0
        %964 = vmatpush1.msra.mxu0 0.0
        %965 = vmatprep.subr.mxu0 0.0
        %966 = vmatpush1.msra.mxu0 0.0
        %967 = vmatprep.subr.mxu0 0.0
        %968 = vmatpush1.msra.mxu0 0.0
        %969 = vmatprep.subr.mxu0 0.0
        %970 = vmatpush1.msra.mxu0 0.0
        %971 = vmatprep.subr.mxu0 0.0
        %972 = vmatpush1.msra.mxu0 0.0
        %973 = vmatprep.subr.mxu0 0.0
        %974 = vmatpush1.msra.mxu0 0.0
        %975 = vmatprep.subr.mxu0 0.0
        %976 = vmatpush1.msra.mxu0 0.0
        %977 = vmatprep.subr.mxu0 0.0
        %978 = vmatpush1.msra.mxu0 0.0
        %979 = vmatprep.subr.mxu0 0.0
        %980 = vmatpush1.msra.mxu0 0.0
        %981 = vmatprep.subr.mxu0 0.0
        %982 = vmatpush1.msra.mxu0 0.0
        %983 = vmatprep.subr.mxu0 0.0
        %984 = vmatpush1.msra.mxu0 0.0
        %985 = vmatprep.subr.mxu0 0.0
        %986 = vmatpush1.msra.mxu0 0.0
        %987 = vmatprep.subr.mxu0 0.0
        %988 = vmatpush1.msra.mxu0 0.0
        %989 = vmatprep.subr.mxu0 0.0
        %990 = vmatpush1.msra.mxu0 0.0
        %991 = vmatprep.subr.mxu0 0.0
        %992 = vmatpush1.msra.mxu0 0.0
        %993 = vmatprep.subr.mxu0 0.0
        %994 = vmatpush1.msra.mxu0 0.0
        %995 = vmatprep.subr.mxu0 0.0
        %996 = vmatpush1.msra.mxu0 0.0
        %997 = vmatprep.subr.mxu0 0.0
        %998 = vmatpush1.msra.mxu0 0.0
        %999 = vmatprep.subr.mxu0 0.0
        %1000 = vmatpush1.msra.mxu0 0.0
        %1001 = vmatprep.subr.mxu0 0.0
        %1002 = vmatpush1.msra.mxu0 0.0
        %1003 = vmatprep.subr.mxu0 0.0
        %1004 = vmatpush1.msra.mxu0 0.0
        %1005 = vmatprep.subr.mxu0 0.0
        %1006 = vmatpush1.msra.mxu0 0.0
        %1007 = vmatprep.subr.mxu0 0.0
        %1008 = vmatpush1.msra.mxu0 0.0
        %1009 = vmatprep.subr.mxu0 0.0
        %1010 = vmatpush1.msra.mxu0 0.0
        %1011 = vmatprep.subr.mxu0 0.0
        %1012 = vmatpush1.msra.mxu0 0.0
        %1013 = vmatprep.subr.mxu0 0.0
        %1014 = vmatpush1.msra.mxu0 0.0
        %1015 = vmatprep.subr.mxu0 0.0
        %1016 = vmatpush1.msra.mxu0 0.0
        %1017 = vmatprep.subr.mxu0 0.0
        %1018 = vmatpush1.msra.mxu0 0.0
        %1019 = vmatprep.subr.mxu0 0.0
        %1020 = vmatpush1.msra.mxu0 0.0
        %1021 = vmatprep.subr.mxu0 0.0
        %1022 = vmatpush1.msra.mxu0 0.0
        %1023 = vmatprep.subr.mxu0 0.0
        %1024 = vmatpush1.msra.mxu0 0.0
        %1025 = vmatprep.mubr.f32.mxu0 0.0
        %1026 = vmatmul.mubr.f32.gmra.mrb[0].mxu0 %v959
        %v1027 = vpop.f32.mrb[0].mxu0
        %v1028 = vadd.f32 0.0, %v1027
        %v1029 = vpop.f32.mrb[0].mxu0
        %1030 = vdwg.mxu0
        %1031 = vrot.lane.b32.xlu0 %v356, 112
        %v1032 = vpop.permute.xlu0 %1031
        %1033 = vrot.lane.b32.xlu0 %v356, 80
        %v1034 = vpop.permute.xlu0 %1033
        %v1035 = vsel %vm362, %v1032, 0
        %v1037 = vsel %vm362, %v1034, 0
        %1039 = vmatprep.subr.mxu0 0.0
        %1040 = vmatpush1.xpose.msra.mxu0 %v1037
        %1041 = vmatprep.subr.mxu0 0.0
        %1042 = vmatpush1.xpose.msra.mxu0 0.0
        %1043 = vmatprep.subr.mxu0 0.0
        %1044 = vmatpush1.xpose.msra.mxu0 0.0
        %1045 = vmatprep.subr.mxu0 0.0
        %1046 = vmatpush1.xpose.msra.mxu0 0.0
        %1047 = vmatprep.subr.mxu0 0.0
        %1048 = vmatpush1.xpose.msra.mxu0 0.0
        %1049 = vmatprep.subr.mxu0 0.0
        %1050 = vmatpush1.xpose.msra.mxu0 0.0
        %1051 = vmatprep.subr.mxu0 0.0
        %1052 = vmatpush1.xpose.msra.mxu0 0.0
        %1053 = vmatprep.subr.mxu0 0.0
        %1054 = vmatpush1.xpose.msra.mxu0 0.0
        %1055 = vmatprep.subr.mxu0 0.0
        %1056 = vmatpush1.xpose.msra.mxu0 0.0
        %1057 = vmatprep.subr.mxu0 0.0
        %1058 = vmatpush1.xpose.msra.mxu0 0.0
        %1059 = vmatprep.subr.mxu0 0.0
        %1060 = vmatpush1.xpose.msra.mxu0 0.0
        %1061 = vmatprep.subr.mxu0 0.0
        %1062 = vmatpush1.xpose.msra.mxu0 0.0
        %1063 = vmatprep.subr.mxu0 0.0
        %1064 = vmatpush1.xpose.msra.mxu0 0.0
        %1065 = vmatprep.subr.mxu0 0.0
        %1066 = vmatpush1.xpose.msra.mxu0 0.0
        %1067 = vmatprep.subr.mxu0 0.0
        %1068 = vmatpush1.xpose.msra.mxu0 0.0
        %1069 = vmatprep.subr.mxu0 0.0
        %1070 = vmatpush1.xpose.msra.mxu0 0.0
        %1071 = vmatprep.subr.mxu0 0.0
        %1072 = vmatpush1.xpose.msra.mxu0 0.0
        %1073 = vmatprep.subr.mxu0 0.0
        %1074 = vmatpush1.xpose.msra.mxu0 0.0
        %1075 = vmatprep.subr.mxu0 0.0
        %1076 = vmatpush1.xpose.msra.mxu0 0.0
        %1077 = vmatprep.subr.mxu0 0.0
        %1078 = vmatpush1.xpose.msra.mxu0 0.0
        %1079 = vmatprep.subr.mxu0 0.0
        %1080 = vmatpush1.xpose.msra.mxu0 0.0
        %1081 = vmatprep.subr.mxu0 0.0
        %1082 = vmatpush1.xpose.msra.mxu0 0.0
        %1083 = vmatprep.subr.mxu0 0.0
        %1084 = vmatpush1.xpose.msra.mxu0 0.0
        %1085 = vmatprep.subr.mxu0 0.0
        %1086 = vmatpush1.xpose.msra.mxu0 0.0
        %1087 = vmatprep.subr.mxu0 0.0
        %1088 = vmatpush1.xpose.msra.mxu0 0.0
        %1089 = vmatprep.subr.mxu0 0.0
        %1090 = vmatpush1.xpose.msra.mxu0 0.0
        %1091 = vmatprep.subr.mxu0 0.0
        %1092 = vmatpush1.xpose.msra.mxu0 0.0
        %1093 = vmatprep.subr.mxu0 0.0
        %1094 = vmatpush1.xpose.msra.mxu0 0.0
        %1095 = vmatprep.subr.mxu0 0.0
        %1096 = vmatpush1.xpose.msra.mxu0 0.0
        %1097 = vmatprep.subr.mxu0 0.0
        %1098 = vmatpush1.xpose.msra.mxu0 0.0
        %1099 = vmatprep.subr.mxu0 0.0
        %1100 = vmatpush1.xpose.msra.mxu0 0.0
        %1101 = vmatprep.subr.mxu0 0.0
        %1102 = vmatpush1.xpose.msra.mxu0 0.0
        %1103 = vmatprep.mubr.f32.mxu0 0.0
        %1104 = vmatmul.mubr.f32.gmra.mrb[0].mxu0 %v1035
        %v1105 = vpop.f32.mrb[0].mxu0
        %v1106 = vadd.f32 0.0, %v1105
        %v1107 = vpop.f32.mrb[0].mxu0
        %1108 = vdwg.mxu0
        %v1109 = vmul.f32 %v1106, 0.5
        %v1110 = vsel %vm438, %v1109, -inf
        %1111 = vmax.xlane.f32.xlu0 %v1110
        %v1112 = vpop.xlane.xlu0 %1111
        %v1113 = vsub.f32 %v1109, %v1112
        %v1114 = vmul.f32 %v1113, 1.442695
        %v1115 = vpow.pop %v1114
        %v1116 = vsel %vm438, %v1115, 0.0
        %1117 = vadd.xlane.f32.xlu0 %v1116
        %v1118 = vpop.xlane.xlu0 %1117
        %v1119 = vrcp.pop %v1118
        %v1120 = vmul.f32 %v1115, %v1119
        %s1121 = scalar_lea.vmem %s279, 32 [#allocation9]
        %1122 = vst.msk [vmem:[%s1121] sm:$0xff] %vm438, %v1120
        %1123 = vrot.lane.b32.xlu0 %v356, 48
        %v1124 = vpop.permute.xlu0 %1123
        %v1127 = vsel %vm438, %v1120, 0
        %1129 = vmatprep.subr.mxu0 0.0
        %1130 = vmatpush1.msra.mxu0 %v1124
        %1131 = vmatprep.subr.mxu0 0.0
        %1132 = vmatpush1.msra.mxu0 0.0
        %1133 = vmatprep.subr.mxu0 0.0
        %1134 = vmatpush1.msra.mxu0 0.0
        %1135 = vmatprep.subr.mxu0 0.0
        %1136 = vmatpush1.msra.mxu0 0.0
        %1137 = vmatprep.subr.mxu0 0.0
        %1138 = vmatpush1.msra.mxu0 0.0
        %1139 = vmatprep.subr.mxu0 0.0
        %1140 = vmatpush1.msra.mxu0 0.0
        %1141 = vmatprep.subr.mxu0 0.0
        %1142 = vmatpush1.msra.mxu0 0.0
        %1143 = vmatprep.subr.mxu0 0.0
        %1144 = vmatpush1.msra.mxu0 0.0
        %1145 = vmatprep.subr.mxu0 0.0
        %1146 = vmatpush1.msra.mxu0 0.0
        %1147 = vmatprep.subr.mxu0 0.0
        %1148 = vmatpush1.msra.mxu0 0.0
        %1149 = vmatprep.subr.mxu0 0.0
        %1150 = vmatpush1.msra.mxu0 0.0
        %1151 = vmatprep.subr.mxu0 0.0
        %1152 = vmatpush1.msra.mxu0 0.0
        %1153 = vmatprep.subr.mxu0 0.0
        %1154 = vmatpush1.msra.mxu0 0.0
        %1155 = vmatprep.subr.mxu0 0.0
        %1156 = vmatpush1.msra.mxu0 0.0
        %1157 = vmatprep.subr.mxu0 0.0
        %1158 = vmatpush1.msra.mxu0 0.0
        %1159 = vmatprep.subr.mxu0 0.0
        %1160 = vmatpush1.msra.mxu0 0.0
        %1161 = vmatprep.subr.mxu0 0.0
        %1162 = vmatpush1.msra.mxu0 0.0
        %1163 = vmatprep.subr.mxu0 0.0
        %1164 = vmatpush1.msra.mxu0 0.0
        %1165 = vmatprep.subr.mxu0 0.0
        %1166 = vmatpush1.msra.mxu0 0.0
        %1167 = vmatprep.subr.mxu0 0.0
        %1168 = vmatpush1.msra.mxu0 0.0
        %1169 = vmatprep.subr.mxu0 0.0
        %1170 = vmatpush1.msra.mxu0 0.0
        %1171 = vmatprep.subr.mxu0 0.0
        %1172 = vmatpush1.msra.mxu0 0.0
        %1173 = vmatprep.subr.mxu0 0.0
        %1174 = vmatpush1.msra.mxu0 0.0
        %1175 = vmatprep.subr.mxu0 0.0
        %1176 = vmatpush1.msra.mxu0 0.0
        %1177 = vmatprep.subr.mxu0 0.0
        %1178 = vmatpush1.msra.mxu0 0.0
        %1179 = vmatprep.subr.mxu0 0.0
        %1180 = vmatpush1.msra.mxu0 0.0
        %1181 = vmatprep.subr.mxu0 0.0
        %1182 = vmatpush1.msra.mxu0 0.0
        %1183 = vmatprep.subr.mxu0 0.0
        %1184 = vmatpush1.msra.mxu0 0.0
        %1185 = vmatprep.subr.mxu0 0.0
        %1186 = vmatpush1.msra.mxu0 0.0
        %1187 = vmatprep.subr.mxu0 0.0
        %1188 = vmatpush1.msra.mxu0 0.0
        %1189 = vmatprep.subr.mxu0 0.0
        %1190 = vmatpush1.msra.mxu0 0.0
        %1191 = vmatprep.subr.mxu0 0.0
        %1192 = vmatpush1.msra.mxu0 0.0
        %1193 = vmatprep.mubr.f32.mxu0 0.0
        %1194 = vmatmul.mubr.f32.gmra.mrb[0].mxu0 %v1127
        %v1195 = vpop.f32.mrb[0].mxu0
        %v1196 = vadd.f32 0.0, %v1195
        %v1197 = vpop.f32.mrb[0].mxu0
        %1198 = vdwg.mxu0
        %1199 = vrot.lane.b32.xlu0 %v356, 108
        %v1200 = vpop.permute.xlu0 %1199
        %1201 = vrot.lane.b32.xlu0 %v356, 76
        %v1202 = vpop.permute.xlu0 %1201
        %v1203 = vsel %vm362, %v1200, 0
        %v1205 = vsel %vm362, %v1202, 0
        %1207 = vmatprep.subr.mxu0 0.0
        %1208 = vmatpush1.xpose.msra.mxu0 %v1205
        %1209 = vmatprep.subr.mxu0 0.0
        %1210 = vmatpush1.xpose.msra.mxu0 0.0
        %1211 = vmatprep.subr.mxu0 0.0
        %1212 = vmatpush1.xpose.msra.mxu0 0.0
        %1213 = vmatprep.subr.mxu0 0.0
        %1214 = vmatpush1.xpose.msra.mxu0 0.0
        %1215 = vmatprep.subr.mxu0 0.0
        %1216 = vmatpush1.xpose.msra.mxu0 0.0
        %1217 = vmatprep.subr.mxu0 0.0
        %1218 = vmatpush1.xpose.msra.mxu0 0.0
        %1219 = vmatprep.subr.mxu0 0.0
        %1220 = vmatpush1.xpose.msra.mxu0 0.0
        %1221 = vmatprep.subr.mxu0 0.0
        %1222 = vmatpush1.xpose.msra.mxu0 0.0
        %1223 = vmatprep.subr.mxu0 0.0
        %1224 = vmatpush1.xpose.msra.mxu0 0.0
        %1225 = vmatprep.subr.mxu0 0.0
        %1226 = vmatpush1.xpose.msra.mxu0 0.0
        %1227 = vmatprep.subr.mxu0 0.0
        %1228 = vmatpush1.xpose.msra.mxu0 0.0
        %1229 = vmatprep.subr.mxu0 0.0
        %1230 = vmatpush1.xpose.msra.mxu0 0.0
        %1231 = vmatprep.subr.mxu0 0.0
        %1232 = vmatpush1.xpose.msra.mxu0 0.0
        %1233 = vmatprep.subr.mxu0 0.0
        %1234 = vmatpush1.xpose.msra.mxu0 0.0
        %1235 = vmatprep.subr.mxu0 0.0
        %1236 = vmatpush1.xpose.msra.mxu0 0.0
        %1237 = vmatprep.subr.mxu0 0.0
        %1238 = vmatpush1.xpose.msra.mxu0 0.0
        %1239 = vmatprep.subr.mxu0 0.0
        %1240 = vmatpush1.xpose.msra.mxu0 0.0
        %1241 = vmatprep.subr.mxu0 0.0
        %1242 = vmatpush1.xpose.msra.mxu0 0.0
        %1243 = vmatprep.subr.mxu0 0.0
        %1244 = vmatpush1.xpose.msra.mxu0 0.0
        %1245 = vmatprep.subr.mxu0 0.0
        %1246 = vmatpush1.xpose.msra.mxu0 0.0
        %1247 = vmatprep.subr.mxu0 0.0
        %1248 = vmatpush1.xpose.msra.mxu0 0.0
        %1249 = vmatprep.subr.mxu0 0.0
        %1250 = vmatpush1.xpose.msra.mxu0 0.0
        %1251 = vmatprep.subr.mxu0 0.0
        %1252 = vmatpush1.xpose.msra.mxu0 0.0
        %1253 = vmatprep.subr.mxu0 0.0
        %1254 = vmatpush1.xpose.msra.mxu0 0.0
        %1255 = vmatprep.subr.mxu0 0.0
        %1256 = vmatpush1.xpose.msra.mxu0 0.0
        %1257 = vmatprep.subr.mxu0 0.0
        %1258 = vmatpush1.xpose.msra.mxu0 0.0
        %1259 = vmatprep.subr.mxu0 0.0
        %1260 = vmatpush1.xpose.msra.mxu0 0.0
        %1261 = vmatprep.subr.mxu0 0.0
        %1262 = vmatpush1.xpose.msra.mxu0 0.0
        %1263 = vmatprep.subr.mxu0 0.0
        %1264 = vmatpush1.xpose.msra.mxu0 0.0
        %1265 = vmatprep.subr.mxu0 0.0
        %1266 = vmatpush1.xpose.msra.mxu0 0.0
        %1267 = vmatprep.subr.mxu0 0.0
        %1268 = vmatpush1.xpose.msra.mxu0 0.0
        %1269 = vmatprep.subr.mxu0 0.0
        %1270 = vmatpush1.xpose.msra.mxu0 0.0
        %1271 = vmatprep.mubr.f32.mxu0 0.0
        %1272 = vmatmul.mubr.f32.gmra.mrb[0].mxu0 %v1203
        %v1273 = vpop.f32.mrb[0].mxu0
        %v1274 = vadd.f32 0.0, %v1273
        %v1275 = vpop.f32.mrb[0].mxu0
        %1276 = vdwg.mxu0
        %v1277 = vmul.f32 %v1274, 0.5
        %v1278 = vsel %vm438, %v1277, -inf
        %1279 = vmax.xlane.f32.xlu0 %v1278
        %v1280 = vpop.xlane.xlu0 %1279
        %v1281 = vsub.f32 %v1277, %v1280
        %v1282 = vmul.f32 %v1281, 1.442695
        %v1283 = vpow.pop %v1282
        %v1284 = vsel %vm438, %v1283, 0.0
        %1285 = vadd.xlane.f32.xlu0 %v1284
        %v1286 = vpop.xlane.xlu0 %1285
        %v1287 = vrcp.pop %v1286
        %v1288 = vmul.f32 %v1283, %v1287
        %s1289 = scalar_lea.vmem %s279, 40 [#allocation9]
        %1290 = vst.msk [vmem:[%s1289] sm:$0xff] %vm438, %v1288
        %1291 = vrot.lane.b32.xlu0 %v356, 44
        %v1292 = vpop.permute.xlu0 %1291
        %v1295 = vsel %vm438, %v1288, 0
        %1297 = vmatprep.subr.mxu0 0.0
        %1298 = vmatpush1.msra.mxu0 %v1292
        %1299 = vmatprep.subr.mxu0 0.0
        %1300 = vmatpush1.msra.mxu0 0.0
        %1301 = vmatprep.subr.mxu0 0.0
        %1302 = vmatpush1.msra.mxu0 0.0
        %1303 = vmatprep.subr.mxu0 0.0
        %1304 = vmatpush1.msra.mxu0 0.0
        %1305 = vmatprep.subr.mxu0 0.0
        %1306 = vmatpush1.msra.mxu0 0.0
        %1307 = vmatprep.subr.mxu0 0.0
        %1308 = vmatpush1.msra.mxu0 0.0
        %1309 = vmatprep.subr.mxu0 0.0
        %1310 = vmatpush1.msra.mxu0 0.0
        %1311 = vmatprep.subr.mxu0 0.0
        %1312 = vmatpush1.msra.mxu0 0.0
        %1313 = vmatprep.subr.mxu0 0.0
        %1314 = vmatpush1.msra.mxu0 0.0
        %1315 = vmatprep.subr.mxu0 0.0
        %1316 = vmatpush1.msra.mxu0 0.0
        %1317 = vmatprep.subr.mxu0 0.0
        %1318 = vmatpush1.msra.mxu0 0.0
        %1319 = vmatprep.subr.mxu0 0.0
        %1320 = vmatpush1.msra.mxu0 0.0
        %1321 = vmatprep.subr.mxu0 0.0
        %1322 = vmatpush1.msra.mxu0 0.0
        %1323 = vmatprep.subr.mxu0 0.0
        %1324 = vmatpush1.msra.mxu0 0.0
        %1325 = vmatprep.subr.mxu0 0.0
        %1326 = vmatpush1.msra.mxu0 0.0
        %1327 = vmatprep.subr.mxu0 0.0
        %1328 = vmatpush1.msra.mxu0 0.0
        %1329 = vmatprep.subr.mxu0 0.0
        %1330 = vmatpush1.msra.mxu0 0.0
        %1331 = vmatprep.subr.mxu0 0.0
        %1332 = vmatpush1.msra.mxu0 0.0
        %1333 = vmatprep.subr.mxu0 0.0
        %1334 = vmatpush1.msra.mxu0 0.0
        %1335 = vmatprep.subr.mxu0 0.0
        %1336 = vmatpush1.msra.mxu0 0.0
        %1337 = vmatprep.subr.mxu0 0.0
        %1338 = vmatpush1.msra.mxu0 0.0
        %1339 = vmatprep.subr.mxu0 0.0
        %1340 = vmatpush1.msra.mxu0 0.0
        %1341 = vmatprep.subr.mxu0 0.0
        %1342 = vmatpush1.msra.mxu0 0.0
        %1343 = vmatprep.subr.mxu0 0.0
        %1344 = vmatpush1.msra.mxu0 0.0
        %1345 = vmatprep.subr.mxu0 0.0
        %1346 = vmatpush1.msra.mxu0 0.0
        %1347 = vmatprep.subr.mxu0 0.0
        %1348 = vmatpush1.msra.mxu0 0.0
        %1349 = vmatprep.subr.mxu0 0.0
        %1350 = vmatpush1.msra.mxu0 0.0
        %1351 = vmatprep.subr.mxu0 0.0
        %1352 = vmatpush1.msra.mxu0 0.0
        %1353 = vmatprep.subr.mxu0 0.0
        %1354 = vmatpush1.msra.mxu0 0.0
        %1355 = vmatprep.subr.mxu0 0.0
        %1356 = vmatpush1.msra.mxu0 0.0
        %1357 = vmatprep.subr.mxu0 0.0
        %1358 = vmatpush1.msra.mxu0 0.0
        %1359 = vmatprep.subr.mxu0 0.0
        %1360 = vmatpush1.msra.mxu0 0.0
        %1361 = vmatprep.mubr.f32.mxu0 0.0
        %1362 = vmatmul.mubr.f32.gmra.mrb[0].mxu0 %v1295
        %v1363 = vpop.f32.mrb[0].mxu0
        %v1364 = vadd.f32 0.0, %v1363
        %v1365 = vpop.f32.mrb[0].mxu0
        %1366 = vdwg.mxu0
        %1367 = vrot.lane.b32.xlu0 %v356, 104
        %v1368 = vpop.permute.xlu0 %1367
        %1369 = vrot.lane.b32.xlu0 %v356, 72
        %v1370 = vpop.permute.xlu0 %1369
        %v1371 = vsel %vm362, %v1368, 0
        %v1373 = vsel %vm362, %v1370, 0
        %1375 = vmatprep.subr.mxu0 0.0
        %1376 = vmatpush1.xpose.msra.mxu0 %v1373
        %1377 = vmatprep.subr.mxu0 0.0
        %1378 = vmatpush1.xpose.msra.mxu0 0.0
        %1379 = vmatprep.subr.mxu0 0.0
        %1380 = vmatpush1.xpose.msra.mxu0 0.0
        %1381 = vmatprep.subr.mxu0 0.0
        %1382 = vmatpush1.xpose.msra.mxu0 0.0
        %1383 = vmatprep.subr.mxu0 0.0
        %1384 = vmatpush1.xpose.msra.mxu0 0.0
        %1385 = vmatprep.subr.mxu0 0.0
        %1386 = vmatpush1.xpose.msra.mxu0 0.0
        %1387 = vmatprep.subr.mxu0 0.0
        %1388 = vmatpush1.xpose.msra.mxu0 0.0
        %1389 = vmatprep.subr.mxu0 0.0
        %1390 = vmatpush1.xpose.msra.mxu0 0.0
        %1391 = vmatprep.subr.mxu0 0.0
        %1392 = vmatpush1.xpose.msra.mxu0 0.0
        %1393 = vmatprep.subr.mxu0 0.0
        %1394 = vmatpush1.xpose.msra.mxu0 0.0
        %1395 = vmatprep.subr.mxu0 0.0
        %1396 = vmatpush1.xpose.msra.mxu0 0.0
        %1397 = vmatprep.subr.mxu0 0.0
        %1398 = vmatpush1.xpose.msra.mxu0 0.0
        %1399 = vmatprep.subr.mxu0 0.0
        %1400 = vmatpush1.xpose.msra.mxu0 0.0
        %1401 = vmatprep.subr.mxu0 0.0
        %1402 = vmatpush1.xpose.msra.mxu0 0.0
        %1403 = vmatprep.subr.mxu0 0.0
        %1404 = vmatpush1.xpose.msra.mxu0 0.0
        %1405 = vmatprep.subr.mxu0 0.0
        %1406 = vmatpush1.xpose.msra.mxu0 0.0
        %1407 = vmatprep.subr.mxu0 0.0
        %1408 = vmatpush1.xpose.msra.mxu0 0.0
        %1409 = vmatprep.subr.mxu0 0.0
        %1410 = vmatpush1.xpose.msra.mxu0 0.0
        %1411 = vmatprep.subr.mxu0 0.0
        %1412 = vmatpush1.xpose.msra.mxu0 0.0
        %1413 = vmatprep.subr.mxu0 0.0
        %1414 = vmatpush1.xpose.msra.mxu0 0.0
        %1415 = vmatprep.subr.mxu0 0.0
        %1416 = vmatpush1.xpose.msra.mxu0 0.0
        %1417 = vmatprep.subr.mxu0 0.0
        %1418 = vmatpush1.xpose.msra.mxu0 0.0
        %1419 = vmatprep.subr.mxu0 0.0
        %1420 = vmatpush1.xpose.msra.mxu0 0.0
        %1421 = vmatprep.subr.mxu0 0.0
        %1422 = vmatpush1.xpose.msra.mxu0 0.0
        %1423 = vmatprep.subr.mxu0 0.0
        %1424 = vmatpush1.xpose.msra.mxu0 0.0
        %1425 = vmatprep.subr.mxu0 0.0
        %1426 = vmatpush1.xpose.msra.mxu0 0.0
        %1427 = vmatprep.subr.mxu0 0.0
        %1428 = vmatpush1.xpose.msra.mxu0 0.0
        %1429 = vmatprep.subr.mxu0 0.0
        %1430 = vmatpush1.xpose.msra.mxu0 0.0
        %1431 = vmatprep.subr.mxu0 0.0
        %1432 = vmatpush1.xpose.msra.mxu0 0.0
        %1433 = vmatprep.subr.mxu0 0.0
        %1434 = vmatpush1.xpose.msra.mxu0 0.0
        %1435 = vmatprep.subr.mxu0 0.0
        %1436 = vmatpush1.xpose.msra.mxu0 0.0
        %1437 = vmatprep.subr.mxu0 0.0
        %1438 = vmatpush1.xpose.msra.mxu0 0.0
        %1439 = vmatprep.mubr.f32.mxu0 0.0
        %1440 = vmatmul.mubr.f32.gmra.mrb[0].mxu0 %v1371
        %v1441 = vpop.f32.mrb[0].mxu0
        %v1442 = vadd.f32 0.0, %v1441
        %v1443 = vpop.f32.mrb[0].mxu0
        %1444 = vdwg.mxu0
        %v1445 = vmul.f32 %v1442, 0.5
        %v1446 = vsel %vm438, %v1445, -inf
        %1447 = vmax.xlane.f32.xlu0 %v1446
        %v1448 = vpop.xlane.xlu0 %1447
        %v1449 = vsub.f32 %v1445, %v1448
        %v1450 = vmul.f32 %v1449, 1.442695
        %v1451 = vpow.pop %v1450
        %v1452 = vsel %vm438, %v1451, 0.0
        %1453 = vadd.xlane.f32.xlu0 %v1452
        %v1454 = vpop.xlane.xlu0 %1453
        %v1455 = vrcp.pop %v1454
        %v1456 = vmul.f32 %v1451, %v1455
        %s1457 = scalar_lea.vmem %s279, 48 [#allocation9]
        %1458 = vst.msk [vmem:[%s1457] sm:$0xff] %vm438, %v1456
        %1459 = vrot.lane.b32.xlu0 %v356, 40
        %v1460 = vpop.permute.xlu0 %1459
        %v1463 = vsel %vm438, %v1456, 0
        %1465 = vmatprep.subr.mxu0 0.0
        %1466 = vmatpush1.msra.mxu0 %v1460
        %1467 = vmatprep.subr.mxu0 0.0
        %1468 = vmatpush1.msra.mxu0 0.0
        %1469 = vmatprep.subr.mxu0 0.0
        %1470 = vmatpush1.msra.mxu0 0.0
        %1471 = vmatprep.subr.mxu0 0.0
        %1472 = vmatpush1.msra.mxu0 0.0
        %1473 = vmatprep.subr.mxu0 0.0
        %1474 = vmatpush1.msra.mxu0 0.0
        %1475 = vmatprep.subr.mxu0 0.0
        %1476 = vmatpush1.msra.mxu0 0.0
        %1477 = vmatprep.subr.mxu0 0.0
        %1478 = vmatpush1.msra.mxu0 0.0
        %1479 = vmatprep.subr.mxu0 0.0
        %1480 = vmatpush1.msra.mxu0 0.0
        %1481 = vmatprep.subr.mxu0 0.0
        %1482 = vmatpush1.msra.mxu0 0.0
        %1483 = vmatprep.subr.mxu0 0.0
        %1484 = vmatpush1.msra.mxu0 0.0
        %1485 = vmatprep.subr.mxu0 0.0
        %1486 = vmatpush1.msra.mxu0 0.0
        %1487 = vmatprep.subr.mxu0 0.0
        %1488 = vmatpush1.msra.mxu0 0.0
        %1489 = vmatprep.subr.mxu0 0.0
        %1490 = vmatpush1.msra.mxu0 0.0
        %1491 = vmatprep.subr.mxu0 0.0
        %1492 = vmatpush1.msra.mxu0 0.0
        %1493 = vmatprep.subr.mxu0 0.0
        %1494 = vmatpush1.msra.mxu0 0.0
        %1495 = vmatprep.subr.mxu0 0.0
        %1496 = vmatpush1.msra.mxu0 0.0
        %1497 = vmatprep.subr.mxu0 0.0
        %1498 = vmatpush1.msra.mxu0 0.0
        %1499 = vmatprep.subr.mxu0 0.0
        %1500 = vmatpush1.msra.mxu0 0.0
        %1501 = vmatprep.subr.mxu0 0.0
        %1502 = vmatpush1.msra.mxu0 0.0
        %1503 = vmatprep.subr.mxu0 0.0
        %1504 = vmatpush1.msra.mxu0 0.0
        %1505 = vmatprep.subr.mxu0 0.0
        %1506 = vmatpush1.msra.mxu0 0.0
        %1507 = vmatprep.subr.mxu0 0.0
        %1508 = vmatpush1.msra.mxu0 0.0
        %1509 = vmatprep.subr.mxu0 0.0
        %1510 = vmatpush1.msra.mxu0 0.0
        %1511 = vmatprep.subr.mxu0 0.0
        %1512 = vmatpush1.msra.mxu0 0.0
        %1513 = vmatprep.subr.mxu0 0.0
        %1514 = vmatpush1.msra.mxu0 0.0
        %1515 = vmatprep.subr.mxu0 0.0
        %1516 = vmatpush1.msra.mxu0 0.0
        %1517 = vmatprep.subr.mxu0 0.0
        %1518 = vmatpush1.msra.mxu0 0.0
        %1519 = vmatprep.subr.mxu0 0.0
        %1520 = vmatpush1.msra.mxu0 0.0
        %1521 = vmatprep.subr.mxu0 0.0
        %1522 = vmatpush1.msra.mxu0 0.0
        %1523 = vmatprep.subr.mxu0 0.0
        %1524 = vmatpush1.msra.mxu0 0.0
        %1525 = vmatprep.subr.mxu0 0.0
        %1526 = vmatpush1.msra.mxu0 0.0
        %1527 = vmatprep.subr.mxu0 0.0
        %1528 = vmatpush1.msra.mxu0 0.0
        %1529 = vmatprep.mubr.f32.mxu0 0.0
        %1530 = vmatmul.mubr.f32.gmra.mrb[0].mxu0 %v1463
        %v1531 = vpop.f32.mrb[0].mxu0
        %v1532 = vadd.f32 0.0, %v1531
        %v1533 = vpop.f32.mrb[0].mxu0
        %1534 = vdwg.mxu0
        %1535 = vrot.lane.b32.xlu0 %v356, 100
        %v1536 = vpop.permute.xlu0 %1535
        %1537 = vrot.lane.b32.xlu0 %v356, 68
        %v1538 = vpop.permute.xlu0 %1537
        %v1539 = vsel %vm362, %v1536, 0
        %v1541 = vsel %vm362, %v1538, 0
        %1543 = vmatprep.subr.mxu0 0.0
        %1544 = vmatpush1.xpose.msra.mxu0 %v1541
        %1545 = vmatprep.subr.mxu0 0.0
        %1546 = vmatpush1.xpose.msra.mxu0 0.0
        %1547 = vmatprep.subr.mxu0 0.0
        %1548 = vmatpush1.xpose.msra.mxu0 0.0
        %1549 = vmatprep.subr.mxu0 0.0
        %1550 = vmatpush1.xpose.msra.mxu0 0.0
        %1551 = vmatprep.subr.mxu0 0.0
        %1552 = vmatpush1.xpose.msra.mxu0 0.0
        %1553 = vmatprep.subr.mxu0 0.0
        %1554 = vmatpush1.xpose.msra.mxu0 0.0
        %1555 = vmatprep.subr.mxu0 0.0
        %1556 = vmatpush1.xpose.msra.mxu0 0.0
        %1557 = vmatprep.subr.mxu0 0.0
        %1558 = vmatpush1.xpose.msra.mxu0 0.0
        %1559 = vmatprep.subr.mxu0 0.0
        %1560 = vmatpush1.xpose.msra.mxu0 0.0
        %1561 = vmatprep.subr.mxu0 0.0
        %1562 = vmatpush1.xpose.msra.mxu0 0.0
        %1563 = vmatprep.subr.mxu0 0.0
        %1564 = vmatpush1.xpose.msra.mxu0 0.0
        %1565 = vmatprep.subr.mxu0 0.0
        %1566 = vmatpush1.xpose.msra.mxu0 0.0
        %1567 = vmatprep.subr.mxu0 0.0
        %1568 = vmatpush1.xpose.msra.mxu0 0.0
        %1569 = vmatprep.subr.mxu0 0.0
        %1570 = vmatpush1.xpose.msra.mxu0 0.0
        %1571 = vmatprep.subr.mxu0 0.0
        %1572 = vmatpush1.xpose.msra.mxu0 0.0
        %1573 = vmatprep.subr.mxu0 0.0
        %1574 = vmatpush1.xpose.msra.mxu0 0.0
        %1575 = vmatprep.subr.mxu0 0.0
        %1576 = vmatpush1.xpose.msra.mxu0 0.0
        %1577 = vmatprep.subr.mxu0 0.0
        %1578 = vmatpush1.xpose.msra.mxu0 0.0
        %1579 = vmatprep.subr.mxu0 0.0
        %1580 = vmatpush1.xpose.msra.mxu0 0.0
        %1581 = vmatprep.subr.mxu0 0.0
        %1582 = vmatpush1.xpose.msra.mxu0 0.0
        %1583 = vmatprep.subr.mxu0 0.0
        %1584 = vmatpush1.xpose.msra.mxu0 0.0
        %1585 = vmatprep.subr.mxu0 0.0
        %1586 = vmatpush1.xpose.msra.mxu0 0.0
        %1587 = vmatprep.subr.mxu0 0.0
        %1588 = vmatpush1.xpose.msra.mxu0 0.0
        %1589 = vmatprep.subr.mxu0 0.0
        %1590 = vmatpush1.xpose.msra.mxu0 0.0
        %1591 = vmatprep.subr.mxu0 0.0
        %1592 = vmatpush1.xpose.msra.mxu0 0.0
        %1593 = vmatprep.subr.mxu0 0.0
        %1594 = vmatpush1.xpose.msra.mxu0 0.0
        %1595 = vmatprep.subr.mxu0 0.0
        %1596 = vmatpush1.xpose.msra.mxu0 0.0
        %1597 = vmatprep.subr.mxu0 0.0
        %1598 = vmatpush1.xpose.msra.mxu0 0.0
        %1599 = vmatprep.subr.mxu0 0.0
        %1600 = vmatpush1.xpose.msra.mxu0 0.0
        %1601 = vmatprep.subr.mxu0 0.0
        %1602 = vmatpush1.xpose.msra.mxu0 0.0
        %1603 = vmatprep.subr.mxu0 0.0
        %1604 = vmatpush1.xpose.msra.mxu0 0.0
        %1605 = vmatprep.subr.mxu0 0.0
        %1606 = vmatpush1.xpose.msra.mxu0 0.0
        %1607 = vmatprep.mubr.f32.mxu0 0.0
        %1608 = vmatmul.mubr.f32.gmra.mrb[0].mxu0 %v1539
        %v1609 = vpop.f32.mrb[0].mxu0
        %v1610 = vadd.f32 0.0, %v1609
        %v1611 = vpop.f32.mrb[0].mxu0
        %1612 = vdwg.mxu0
        %v1613 = vmul.f32 %v1610, 0.5
        %v1614 = vsel %vm438, %v1613, -inf
        %1615 = vmax.xlane.f32.xlu0 %v1614
        %v1616 = vpop.xlane.xlu0 %1615
        %v1617 = vsub.f32 %v1613, %v1616
        %v1618 = vmul.f32 %v1617, 1.442695
        %v1619 = vpow.pop %v1618
        %v1620 = vsel %vm438, %v1619, 0.0
        %1621 = vadd.xlane.f32.xlu0 %v1620
        %v1622 = vpop.xlane.xlu0 %1621
        %v1623 = vrcp.pop %v1622
        %v1624 = vmul.f32 %v1619, %v1623
        %s1625 = scalar_lea.vmem %s279, 56 [#allocation9]
        %1626 = vst.msk [vmem:[%s1625] sm:$0xff] %vm438, %v1624
        %1627 = vrot.lane.b32.xlu0 %v356, 36
        %v1628 = vpop.permute.xlu0 %1627
        %v1631 = vsel %vm438, %v1624, 0
        %1633 = vmatprep.subr.mxu0 0.0
        %1634 = vmatpush1.msra.mxu0 %v1628
        %1635 = vmatprep.subr.mxu0 0.0
        %1636 = vmatpush1.msra.mxu0 0.0
        %1637 = vmatprep.subr.mxu0 0.0
        %1638 = vmatpush1.msra.mxu0 0.0
        %1639 = vmatprep.subr.mxu0 0.0
        %1640 = vmatpush1.msra.mxu0 0.0
        %1641 = vmatprep.subr.mxu0 0.0
        %1642 = vmatpush1.msra.mxu0 0.0
        %1643 = vmatprep.subr.mxu0 0.0
        %1644 = vmatpush1.msra.mxu0 0.0
        %1645 = vmatprep.subr.mxu0 0.0
        %1646 = vmatpush1.msra.mxu0 0.0
        %1647 = vmatprep.subr.mxu0 0.0
        %1648 = vmatpush1.msra.mxu0 0.0
        %1649 = vmatprep.subr.mxu0 0.0
        %1650 = vmatpush1.msra.mxu0 0.0
        %1651 = vmatprep.subr.mxu0 0.0
        %1652 = vmatpush1.msra.mxu0 0.0
        %1653 = vmatprep.subr.mxu0 0.0
        %1654 = vmatpush1.msra.mxu0 0.0
        %1655 = vmatprep.subr.mxu0 0.0
        %1656 = vmatpush1.msra.mxu0 0.0
        %1657 = vmatprep.subr.mxu0 0.0
        %1658 = vmatpush1.msra.mxu0 0.0
        %1659 = vmatprep.subr.mxu0 0.0
        %1660 = vmatpush1.msra.mxu0 0.0
        %1661 = vmatprep.subr.mxu0 0.0
        %1662 = vmatpush1.msra.mxu0 0.0
        %1663 = vmatprep.subr.mxu0 0.0
        %1664 = vmatpush1.msra.mxu0 0.0
        %1665 = vmatprep.subr.mxu0 0.0
        %1666 = vmatpush1.msra.mxu0 0.0
        %1667 = vmatprep.subr.mxu0 0.0
        %1668 = vmatpush1.msra.mxu0 0.0
        %1669 = vmatprep.subr.mxu0 0.0
        %1670 = vmatpush1.msra.mxu0 0.0
        %1671 = vmatprep.subr.mxu0 0.0
        %1672 = vmatpush1.msra.mxu0 0.0
        %1673 = vmatprep.subr.mxu0 0.0
        %1674 = vmatpush1.msra.mxu0 0.0
        %1675 = vmatprep.subr.mxu0 0.0
        %1676 = vmatpush1.msra.mxu0 0.0
        %1677 = vmatprep.subr.mxu0 0.0
        %1678 = vmatpush1.msra.mxu0 0.0
        %1679 = vmatprep.subr.mxu0 0.0
        %1680 = vmatpush1.msra.mxu0 0.0
        %1681 = vmatprep.subr.mxu0 0.0
        %1682 = vmatpush1.msra.mxu0 0.0
        %1683 = vmatprep.subr.mxu0 0.0
        %1684 = vmatpush1.msra.mxu0 0.0
        %1685 = vmatprep.subr.mxu0 0.0
        %1686 = vmatpush1.msra.mxu0 0.0
        %1687 = vmatprep.subr.mxu0 0.0
        %1688 = vmatpush1.msra.mxu0 0.0
        %1689 = vmatprep.subr.mxu0 0.0
        %1690 = vmatpush1.msra.mxu0 0.0
        %1691 = vmatprep.subr.mxu0 0.0
        %1692 = vmatpush1.msra.mxu0 0.0
        %1693 = vmatprep.subr.mxu0 0.0
        %1694 = vmatpush1.msra.mxu0 0.0
        %1695 = vmatprep.subr.mxu0 0.0
        %1696 = vmatpush1.msra.mxu0 0.0
        %1697 = vmatprep.mubr.f32.mxu0 0.0
        %1698 = vmatmul.mubr.f32.gmra.mrb[0].mxu0 %v1631
        %v1699 = vpop.f32.mrb[0].mxu0
        %v1700 = vadd.f32 0.0, %v1699
        %v1701 = vpop.f32.mrb[0].mxu0
        %1702 = vdwg.mxu0
        %1704 = vrot.lane.b32.xlu0 %v692, 4
        %v1705 = vpop.permute.xlu0 %1704
        %1708 = vrot.lane.b32.xlu0 %v860, 8
        %v1709 = vpop.permute.xlu0 %1708
        %1712 = vrot.lane.b32.xlu0 %v1028, 12
        %v1713 = vpop.permute.xlu0 %1712
        %1716 = vrot.lane.b32.xlu0 %v1196, 16
        %v1717 = vpop.permute.xlu0 %1716
        %1720 = vrot.lane.b32.xlu0 %v1364, 20
        %v1721 = vpop.permute.xlu0 %1720
        %1724 = vrot.lane.b32.xlu0 %v1532, 24
        %v1725 = vpop.permute.xlu0 %1724
        %1728 = vrot.lane.b32.xlu0 %v1700, 28
        %v1729 = vpop.permute.xlu0 %1728
        %v1731 = vsel %vm362, %v524, %v1705
        %v1732 = vsel %vm438, %v1731, %v1709
        %vm1733 = vcmask 97280
        %v1734 = vsel %vm1733, %v1732, %v1713
        %vm1735 = vcmask 130048
        %v1736 = vsel %vm1735, %v1734, %v1717
        %vm1737 = vcmask 162816
        %v1738 = vsel %vm1737, %v1736, %v1721
        %vm1739 = vcmask 195584
        %v1740 = vsel %vm1739, %v1738, %v1725
        %vm1741 = vcmask 228352
        %v1742 = vsel %vm1741, %v1740, %v1729
        %v1743 = vld [vmem:[#allocation7] sm:$0xff]
        %v1744 = vld [vmem:[#allocation7 + $0x8] sm:$0xff]
        %v1745 = vld [vmem:[#allocation7 + $0x10] sm:$0xff]
        %v1746 = vld [vmem:[#allocation7 + $0x18] sm:$0xff]
        %v1747 = vld [vmem:[%s3] sm:$0x1]
        %v1749 = vlaneseq
        %v1750 = vshrl.u32 %v1749, 7
        %v1751 = vsub.s32 0, %v1750
        %v1752 = vrot.slane %v1747, %v1751
        %v1755 = vsel %vm285, %v1742, 0
        %1757 = vmatprep.subr.mxu0 0.0
        %1758 = vmatpush1.msra.mxu0 %v1743
        %1759 = vmatprep.subr.mxu0 0.0
        %1760 = vmatpush1.msra.mxu0 %v1744
        %1761 = vmatprep.subr.mxu0 0.0
        %1762 = vmatpush1.msra.mxu0 %v1745
        %1763 = vmatprep.subr.mxu0 0.0
        %1764 = vmatpush1.msra.mxu0 %v1746
        %1765 = vmatprep.subr.mxu0 0.0
        %1766 = vmatpush1.msra.mxu0 0.0
        %1767 = vmatprep.subr.mxu0 0.0
        %1768 = vmatpush1.msra.mxu0 0.0
        %1769 = vmatprep.subr.mxu0 0.0
        %1770 = vmatpush1.msra.mxu0 0.0
        %1771 = vmatprep.subr.mxu0 0.0
        %1772 = vmatpush1.msra.mxu0 0.0
        %1773 = vmatprep.subr.mxu0 0.0
        %1774 = vmatpush1.msra.mxu0 0.0
        %1775 = vmatprep.subr.mxu0 0.0
        %1776 = vmatpush1.msra.mxu0 0.0
        %1777 = vmatprep.subr.mxu0 0.0
        %1778 = vmatpush1.msra.mxu0 0.0
        %1779 = vmatprep.subr.mxu0 0.0
        %1780 = vmatpush1.msra.mxu0 0.0
        %1781 = vmatprep.subr.mxu0 0.0
        %1782 = vmatpush1.msra.mxu0 0.0
        %1783 = vmatprep.subr.mxu0 0.0
        %1784 = vmatpush1.msra.mxu0 0.0
        %1785 = vmatprep.subr.mxu0 0.0
        %1786 = vmatpush1.msra.mxu0 0.0
        %1787 = vmatprep.subr.mxu0 0.0
        %1788 = vmatpush1.msra.mxu0 0.0
        %1789 = vmatprep.subr.mxu0 0.0
        %1790 = vmatpush1.msra.mxu0 0.0
        %1791 = vmatprep.subr.mxu0 0.0
        %1792 = vmatpush1.msra.mxu0 0.0
        %1793 = vmatprep.subr.mxu0 0.0
        %1794 = vmatpush1.msra.mxu0 0.0
        %1795 = vmatprep.subr.mxu0 0.0
        %1796 = vmatpush1.msra.mxu0 0.0
        %1797 = vmatprep.subr.mxu0 0.0
        %1798 = vmatpush1.msra.mxu0 0.0
        %1799 = vmatprep.subr.mxu0 0.0
        %1800 = vmatpush1.msra.mxu0 0.0
        %1801 = vmatprep.subr.mxu0 0.0
        %1802 = vmatpush1.msra.mxu0 0.0
        %1803 = vmatprep.subr.mxu0 0.0
        %1804 = vmatpush1.msra.mxu0 0.0
        %1805 = vmatprep.subr.mxu0 0.0
        %1806 = vmatpush1.msra.mxu0 0.0
        %1807 = vmatprep.subr.mxu0 0.0
        %1808 = vmatpush1.msra.mxu0 0.0
        %1809 = vmatprep.subr.mxu0 0.0
        %1810 = vmatpush1.msra.mxu0 0.0
        %1811 = vmatprep.subr.mxu0 0.0
        %1812 = vmatpush1.msra.mxu0 0.0
        %1813 = vmatprep.subr.mxu0 0.0
        %1814 = vmatpush1.msra.mxu0 0.0
        %1815 = vmatprep.subr.mxu0 0.0
        %1816 = vmatpush1.msra.mxu0 0.0
        %1817 = vmatprep.subr.mxu0 0.0
        %1818 = vmatpush1.msra.mxu0 0.0
        %1819 = vmatprep.subr.mxu0 0.0
        %1820 = vmatpush1.msra.mxu0 0.0
        %1821 = vmatprep.mubr.f32.mxu0 0.0
        %1822 = vmatmul.mubr.f32.gmra.mrb[0].mxu0 %v1755
        %v1823 = vpop.f32.mrb[0].mxu0
        %v1824 = vadd.f32 %v1752, %v1823
        %v1825 = vpop.f32.mrb[0].mxu0
        %1826 = vdwg.mxu0
        %1827 = vst.msk [vmem:[%s272] sm:$0xff] %vm285, %v1824
        %s1828 = sand.u32 %s124, 1
        %s1829 = scalar_lea.sflag [#allocation4], %s1828
        %s1830 = sand.u32 %s124, 1
        %s1831 = smul.addr %s1830, 8
        %s1832 = scalar_lea.vmem [#allocation8], %s1831
        %s1833 = sand.u32 %s150, 1
        %s1834 = scalar_lea.sflag [#allocation10], %s1833
        %s1835 = sand.u32 %s150, 1
        %s1836 = smul.addr %s1835, 64
        %s1837 = scalar_lea.vmem [#allocation9], %s1836
        // Predicated region
        $region49: #{tpu_custom_call.1} parent=35 // pred_check
          %p1838 = pneg %p134
        $region50: #{tpu_custom_call.1} parent=35 // pred_check_branch
          %1840 = sbr.rel (%p1838) target = $region52
        $region51: #{tpu_custom_call.1} parent=35 // pred_region
          %s1842 = ssub.s32 128, 128
          %1843 = vsyncadd %s1829, %s1842
          %s1844 = smul.addr %s27, 128
          %s1845 = scalar_lea.hbm %s4, %s1844
          %s1847 = sshll.u32 %s1832, 4
          %s1848 = int_to_ptr.vmem [resolvable:$true] %s1847
          %1850 = dma.vmem_to_hbm [thread:$0]  %s1848, 128, %s1845, %s1829
        $region52: #{tpu_custom_call.1} parent=35 // pred_fallthru
          _
        // Predicated region
        $region53: #{tpu_custom_call.1} parent=35 // pred_check
          %p1851 = pneg %p160
        $region54: #{tpu_custom_call.1} parent=35 // pred_check_branch
          %1853 = sbr.rel (%p1851) target = $region56
        $region55: #{tpu_custom_call.1} parent=35 // pred_region
          %s1855 = ssub.s32 1024, 1024
          %1856 = vsyncadd %s1834, %s1855
          %s1857 = smul.addr %s27, 8
          %s1858 = smul.addr %s1857, 128
          %s1859 = scalar_lea.hbm %s5, %s1858
          %s1860 = sshll.u32 %s1837, 4
          %s1861 = int_to_ptr.vmem [resolvable:$true] %s1860
          %1866 = dma.vmem_to_hbm [thread:$0]  %s1861, 1024, %s1859, %s1834, 128, 128, 8
        $region56: #{tpu_custom_call.1} parent=35 // pred_fallthru
          _
      $region36: #{tpu_custom_call.1} parent=5 // pred_fallthru
        _
      %p1867 = scmp.le.s32.totalorder 2, %s22
      // Predicated region
      $region57: #{tpu_custom_call.1} parent=5 // pred_check
        %p1868 = pneg %p1867
      $region58: #{tpu_custom_call.1} parent=5 // pred_check_branch
        %1870 = sbr.rel (%p1868) target = $region60
      $region59: #{tpu_custom_call.1} parent=5 // pred_region
        %s1871 = ssub.s32 %s22, 2
        // Predicated region
        $region61: #{tpu_custom_call.1} parent=59 // pred_check
          %p1872 = pneg %p140
        $region62: #{tpu_custom_call.1} parent=59 // pred_check_branch
          %1874 = sbr.rel (%p1872) target = $region64
        $region63: #{tpu_custom_call.1} parent=59 // pred_region
          %s1875 = sand.u32 %s125, 1
          %s1876 = scalar_lea.sflag [#allocation4], %s1875
          %s1877 = sand.u32 %s125, 1
          %s1878 = smul.addr %s1877, 8
          %s1879 = scalar_lea.vmem [#allocation8], %s1878
          %1880 = dma.done %s1876, 128
        $region64: #{tpu_custom_call.1} parent=59 // pred_fallthru
          _
        // Predicated region
        $region65: #{tpu_custom_call.1} parent=59 // pred_check
          %p1881 = pneg %p166
        $region66: #{tpu_custom_call.1} parent=59 // pred_check_branch
          %1883 = sbr.rel (%p1881) target = $region68
        $region67: #{tpu_custom_call.1} parent=59 // pred_region
          %s1884 = sand.u32 %s151, 1
          %s1885 = scalar_lea.sflag [#allocation10], %s1884
          %s1886 = sand.u32 %s151, 1
          %s1887 = smul.addr %s1886, 64
          %s1888 = scalar_lea.vmem [#allocation9], %s1887
          %1889 = dma.done %s1885, 1024
        $region68: #{tpu_custom_call.1} parent=59 // pred_fallthru
          _
      $region60: #{tpu_custom_call.1} parent=5 // pred_fallthru
        _
    $region6: #{tpu_custom_call.1} parent=1 // loop_footer
      %s26 = sadd.s32 1, %s22
    $region7: #{tpu_custom_call.1} parent=1 // loop_footer_branch
      %21 = sbr.rel target = $region3
    $region8: #{tpu_custom_call.1} parent=1 // loop_exit
      _
    %1890 = vsyncpa [#allocation3], 1
    %s1891 = scalar_lea.sflag [#allocation3], 1
    %1892 = vsyncpa %s1891, 1
    %1893 = vsyncpa [#allocation6], 1
    %1894 = vsyncpa [#allocation4], 1
    %s1895 = scalar_lea.sflag [#allocation4], 1
    %1896 = vsyncpa %s1895, 1
    %1897 = vsyncpa [#allocation10], 1
    %s1898 = scalar_lea.sflag [#allocation10], 1
    %1899 = vsyncpa %s1898, 1

</llo_original>
